<compile_context>
chip_gen: v7x
topology: tpu7x:2x2x1
jax: 0.10.0
libtpu: 0.0.40
codegen_flags: <defaults>
</compile_context>

<pallas_src>
import math
import jax
import jax.numpy as jnp
from jax import lax
from jax.experimental import pallas as pl
from jax.experimental.pallas import tpu as pltpu

_LANE = 128
_SUBLANE = 8
_DELTA = 1e-6


def _round_up(v, m):
    return ((v + m - 1) // m) * m


def _full_spec(shape):
    return pl.BlockSpec(shape, lambda i, _n=len(shape): (0,) * _n)


def _make_kernel(T, Bp, Hp, mxu_dtype):
    def kernel(x_ref, len_ref, wi_ref, wh_ref, bi_ref, bhn_ref,
               w1_ref, b1_ref, w2_ref, b2_ref, out_ref, gi_ref):
        # Phase 1: input-gate projections for every timestep in ONE matmul.
        # bi already contains b_ir+b_hr | b_iz+b_hz | b_in (folded in wrapper).
        gi_ref[...] = (
            jnp.dot(x_ref[...], wi_ref[...], preferred_element_type=jnp.float32)
            + bi_ref[...])

        lengths = len_ref[...]            # (Bp, 1) int32; padded rows are 0
        bhn = bhn_ref[...]                # (1, Hp)  f32
        wh = wh_ref[...]                  # (Hp, 3Hp) mxu_dtype (loop-invariant)

        def step(t, carry):
            h, hlast = carry
            base = pl.multiple_of(t * Bp, Bp)
            gi_t = gi_ref[pl.ds(base, Bp), :]                       # (Bp, 3Hp)
            gh = jnp.dot(h.astype(mxu_dtype), wh,
                         preferred_element_type=jnp.float32)        # (Bp, 3Hp)
            # PyTorch gate order: r, z, n (lane-aligned 128-wide slices).
            r = jax.nn.sigmoid(gi_t[:, 0:Hp] + gh[:, 0:Hp])
            z = jax.nn.sigmoid(gi_t[:, Hp:2 * Hp] + gh[:, Hp:2 * Hp])
            n = jnp.tanh(gi_t[:, 2 * Hp:3 * Hp]
                         + r * (gh[:, 2 * Hp:3 * Hp] + bhn))
            h_new = (1.0 - z) * n + z * h
            is_last = lengths == (t + 1)                            # (Bp, 1)
            return h_new, jnp.where(is_last, h_new, hlast)

        zeros = jnp.zeros((Bp, Hp), jnp.float32)
        unroll = True if T <= 16 else 8   # partial unroll at production T
        _, hlast = lax.fori_loop(0, T, step, (zeros, zeros), unroll=unroll)

        # Head: fc1 + ReLU, fc2 (lane-padded to 128) + sigmoid, clamp.
        y = (jnp.dot(hlast.astype(mxu_dtype), w1_ref[...],
                     preferred_element_type=jnp.float32) + b1_ref[...])
        y = jnp.maximum(y, 0.0)
        o = (jnp.dot(y.astype(mxu_dtype), w2_ref[...],
                     preferred_element_type=jnp.float32) + b2_ref[...])
        o = jax.nn.sigmoid(o)
        out_ref[...] = jnp.clip(o, _DELTA, 1.0 - _DELTA)

    return kernel


def prepare_params(params, mxu_dtype=jnp.float32):
    """One-time packing/padding of weights (hoisted out of the per-call path).

    mxu_dtype: dtype of MXU operands (jnp.bfloat16 recommended on v6e/v7x at
    production sizes; f32 here for exact 1e-5 parity with the reference).
    """
    D, H = params["w_ir"].shape
    Hp = _round_up(H, _LANE)
    Dp = _round_up(D, _LANE)
    H3 = 3 * Hp
    f32 = jnp.float32

    def pack3(wr, wz, wn, rows, src_rows):
        w = jnp.zeros((rows, H3), f32)
        w = w.at[:src_rows, 0:H].set(wr)
        w = w.at[:src_rows, Hp:Hp + H].set(wz)
        w = w.at[:src_rows, 2 * Hp:2 * Hp + H].set(wn)
        return w

    wi_all = pack3(params["w_ir"], params["w_iz"], params["w_in"], Dp, D)
    wh_all = pack3(params["w_hr"], params["w_hz"], params["w_hn"], Hp, H)

    # Fold b_hr / b_hz into the phase-1 bias; only b_hn stays in the loop.
    bi_all = jnp.zeros((1, H3), f32)
    bi_all = bi_all.at[:, 0:H].set(params["b_ir"] + params["b_hr"])
    bi_all = bi_all.at[:, Hp:Hp + H].set(params["b_iz"] + params["b_hz"])
    bi_all = bi_all.at[:, 2 * Hp:2 * Hp + H].set(params["b_in"])
    bhn = jnp.zeros((1, Hp), f32).at[:, :H].set(params["b_hn"])

    w1p = jnp.zeros((Hp, Hp), f32).at[:H, :H].set(params["w1"])
    b1p = jnp.zeros((1, Hp), f32).at[:, :H].set(params["b1"])
    w2p = jnp.zeros((Hp, _LANE), f32).at[:H, 0:1].set(params["w2"])
    b2p = jnp.zeros((1, _LANE), f32).at[:, 0:1].set(params["b2"])

    return {
        "wi": wi_all.astype(mxu_dtype),
        "wh": wh_all.astype(mxu_dtype),
        "bi": bi_all,
        "bhn": bhn,
        "w1": w1p.astype(mxu_dtype),
        "b1": b1p,
        "w2": w2p.astype(mxu_dtype),
        "b2": b2p,
    }


@jax.jit
def vnet_forward(x_padded, lengths, packed):
    """x_padded: [B, T, D] float32 (zero-padded), lengths: [B] int32."""
    B, T, D = x_padded.shape
    Dp, H3 = packed["wi"].shape
    Hp = H3 // 3
    mxu_dtype = packed["wi"].dtype
    Bp = _round_up(max(B, _SUBLANE), _SUBLANE)
    f32 = jnp.float32

    # Per-call work: pad + time-major flatten x, pad the lengths column.
    # TODO(synk): at production sizes fuse this transpose into the producer of
    # x (it is one extra HBM round trip of x per call).
    x = jnp.pad(x_padded.astype(f32), ((0, Bp - B), (0, 0), (0, Dp - D)))
    x_flat = jnp.transpose(x, (1, 0, 2)).reshape(T * Bp, Dp).astype(mxu_dtype)
    len_col = jnp.pad(lengths.astype(jnp.int32).reshape(B, 1),
                      ((0, Bp - B), (0, 0)))                     # (Bp, 1)

    out = pl.pallas_call(
        _make_kernel(T, Bp, Hp, mxu_dtype),
        out_shape=jax.ShapeDtypeStruct((Bp, _LANE), f32),
        grid=(1,),
        in_specs=[
            _full_spec((T * Bp, Dp)),     # x (time-major, flattened)
            _full_spec((Bp, 1)),          # lengths column (int32)
            _full_spec((Dp, H3)),         # W_i packed (r|z|n)
            _full_spec((Hp, H3)),         # W_h packed (r|z|n)
            _full_spec((1, H3)),          # folded phase-1 bias
            _full_spec((1, Hp)),          # b_hn
            _full_spec((Hp, Hp)),         # fc1 weight
            _full_spec((1, Hp)),          # fc1 bias
            _full_spec((Hp, _LANE)),      # fc2 weight (lane-padded)
            _full_spec((1, _LANE)),       # fc2 bias (lane-padded)
        ],
        out_specs=_full_spec((Bp, _LANE)),
        scratch_shapes=[pltpu.VMEM((T * Bp, H3), f32)],   # hoisted gi, all t
        compiler_params=pltpu.CompilerParams(
            dimension_semantics=("arbitrary",)),
    )(x_flat, len_col, packed["wi"], packed["wh"], packed["bi"], packed["bhn"],
      packed["w1"], packed["b1"], packed["w2"], packed["b2"])

    return out[:B, 0:1]


def init_params(key, obs_dim, hidden_dim, num_agents):
    """Deterministic init mirroring PyTorch default U(-1/sqrt(H), 1/sqrt(H))."""
    D = obs_dim * num_agents
    H = hidden_dim
    bound = 1.0 / math.sqrt(H)
    ks = jax.random.split(key, 18)
    u = lambda k, shape: jax.random.uniform(k, shape, jnp.float32, -bound, bound)
    return {
        "w_ir": u(ks[0], (D, H)), "w_iz": u(ks[1], (D, H)), "w_in": u(ks[2], (D, H)),
        "w_hr": u(ks[3], (H, H)), "w_hz": u(ks[4], (H, H)), "w_hn": u(ks[5], (H, H)),
        "b_ir": u(ks[6], (1, H)), "b_iz": u(ks[7], (1, H)), "b_in": u(ks[8], (1, H)),
        "b_hr": u(ks[9], (1, H)), "b_hz": u(ks[10], (1, H)), "b_hn": u(ks[11], (1, H)),
        "w1": u(ks[12], (H, H)), "b1": u(ks[13], (1, H)),
        "w2": u(ks[14], (H, 1)), "b2": u(ks[15], (1, 1)),
    }


def reference_forward(x_padded, lengths, params):
    """Pure-JAX reference (mirrors the PyTorch forward) for validation."""
    B, T, D = x_padded.shape
    H = params["w_hr"].shape[0]

    def step(h, x_t):
        gi_r = x_t @ params["w_ir"] + params["b_ir"]
        gi_z = x_t @ params["w_iz"] + params["b_iz"]
        gi_n = x_t @ params["w_in"] + params["b_in"]
        gh_r = h @ params["w_hr"] + params["b_hr"]
        gh_z = h @ params["w_hz"] + params["b_hz"]
        gh_n = h @ params["w_hn"] + params["b_hn"]
        r = jax.nn.sigmoid(gi_r + gh_r)
        z = jax.nn.sigmoid(gi_z + gh_z)
        n = jnp.tanh(gi_n + r * gh_n)
        h_new = (1.0 - z) * n + z * h
        return h_new, h_new

    h0 = jnp.zeros((B, H), jnp.float32)
    _, hs = lax.scan(step, h0, jnp.transpose(x_padded, (1, 0, 2)))   # [T, B, H]
    hs = jnp.transpose(hs, (1, 0, 2))                                # [B, T, H]
    mask = (jnp.arange(T)[None, :] < lengths[:, None]).astype(jnp.float32)
    hs = hs * mask[:, :, None]
    h_last = hs[jnp.arange(B), lengths - 1]                          # [B, H]
    y = jax.nn.relu(h_last @ params["w1"] + params["b1"])
    o = jax.nn.sigmoid(y @ params["w2"] + params["b2"])
    return jnp.clip(o, 1e-6, 1.0 - 1e-6)


if __name__ == "__main__":
    obs_dim, num_agents, hidden_dim = 4, 2, 32
    D = obs_dim * num_agents

    key = jax.random.PRNGKey(0)
    k_param, k_data = jax.random.split(key)
    params = init_params(k_param, obs_dim, hidden_dim, num_agents)

    # One-time weight packing/padding (hoisted out of the per-call path).
    packed = prepare_params(params, mxu_dtype=jnp.float32)

    # Variable-length sequences (the list-of-tensors input of the PyTorch
    # module), padded to [B, T, D] like pad_sequence(batch_first=True).
    seq_lens = [8, 5, 3, 8]
    B, T = len(seq_lens), max(seq_lens)
    data = jax.random.normal(k_data, (B, T, D), jnp.float32)
    t_idx = jnp.arange(T)[None, :]
    lengths = jnp.array(seq_lens, dtype=jnp.int32)
    x_padded = data * (t_idx < lengths[:, None]).astype(jnp.float32)[:, :, None]

    out = vnet_forward(x_padded, lengths, packed)
    out = jax.block_until_ready(out)

    ref = reference_forward(x_padded, lengths, params)
    assert out.shape == (B, 1)
    assert jnp.allclose(out, ref, atol=1e-5, rtol=1e-5), (out, ref)

    print("KERNEL_OK")
</pallas_src>

<mosaic_0001>
module attributes {stable_mosaic.version = 11 : i64} {
  func.func @kernel(%arg0: i32, %arg1: memref<64x128xf32, #tpu.memory_space<vmem>>, %arg2: memref<8x1xi32, #tpu.memory_space<vmem>>, %arg3: memref<128x384xf32, #tpu.memory_space<vmem>>, %arg4: memref<128x384xf32, #tpu.memory_space<vmem>>, %arg5: memref<1x384xf32, #tpu.memory_space<vmem>>, %arg6: memref<1x128xf32, #tpu.memory_space<vmem>>, %arg7: memref<128x128xf32, #tpu.memory_space<vmem>>, %arg8: memref<1x128xf32, #tpu.memory_space<vmem>>, %arg9: memref<128x128xf32, #tpu.memory_space<vmem>>, %arg10: memref<1x128xf32, #tpu.memory_space<vmem>>, %arg11: memref<8x128xf32, #tpu.memory_space<vmem>>, %arg12: memref<64x384xf32, #tpu.memory_space<vmem>>) attributes {dimension_semantics = [#tpu.dimension_semantics<arbitrary>], iteration_bounds = array<i64: 1>, scalar_prefetch = 0 : i64, scratch_operands = 1 : i64, tpu.core_type = #tpu.core_type<tc>, window_params = [{pipeline_mode = #tpu.pipeline_mode<synchronous>, transform_indices = @transform_0, window_bounds = array<i64: 64, 128>}, {pipeline_mode = #tpu.pipeline_mode<synchronous>, transform_indices = @transform_1, window_bounds = array<i64: 8, 1>}, {pipeline_mode = #tpu.pipeline_mode<synchronous>, transform_indices = @transform_2, window_bounds = array<i64: 128, 384>}, {pipeline_mode = #tpu.pipeline_mode<synchronous>, transform_indices = @transform_3, window_bounds = array<i64: 128, 384>}, {pipeline_mode = #tpu.pipeline_mode<synchronous>, transform_indices = @transform_4, window_bounds = array<i64: 1, 384>}, {pipeline_mode = #tpu.pipeline_mode<synchronous>, transform_indices = @transform_5, window_bounds = array<i64: 1, 128>}, {pipeline_mode = #tpu.pipeline_mode<synchronous>, transform_indices = @transform_6, window_bounds = array<i64: 128, 128>}, {pipeline_mode = #tpu.pipeline_mode<synchronous>, transform_indices = @transform_7, window_bounds = array<i64: 1, 128>}, {pipeline_mode = #tpu.pipeline_mode<synchronous>, transform_indices = @transform_8, window_bounds = array<i64: 128, 128>}, {pipeline_mode = #tpu.pipeline_mode<synchronous>, transform_indices = @transform_9, window_bounds = array<i64: 1, 128>}, {pipeline_mode = #tpu.pipeline_mode<synchronous>, transform_indices = @transform_10, window_bounds = array<i64: 8, 128>}]} {
    %c0 = arith.constant 0 : index
    %c0_0 = arith.constant 0 : index
    %0 = vector.load %arg1[%c0, %c0_0] : memref<64x128xf32, #tpu.memory_space<vmem>>, vector<64x128xf32>
    %c0_1 = arith.constant 0 : index
    %c0_2 = arith.constant 0 : index
    %1 = vector.load %arg3[%c0_1, %c0_2] : memref<128x384xf32, #tpu.memory_space<vmem>>, vector<128x384xf32>
    %cst = arith.constant dense<0.000000e+00> : vector<64x384xf32>
    %2 = tpu.matmul %0, %1, %cst {dimension_numbers = #tpu.dot_dimension_numbers<[1], [0], [0], [1], [0, 0, 1, 1], [], []>} : vector<64x128xf32>, vector<128x384xf32>, vector<64x384xf32> -> vector<64x384xf32>
    %c0_3 = arith.constant 0 : index
    %c0_4 = arith.constant 0 : index
    %3 = vector.load %arg5[%c0_3, %c0_4] : memref<1x384xf32, #tpu.memory_space<vmem>>, vector<1x384xf32>
    %4 = vector.broadcast %3 : vector<1x384xf32> to vector<64x384xf32>
    %5 = arith.addf %2, %4 : vector<64x384xf32>
    %c0_5 = arith.constant 0 : index
    %c0_6 = arith.constant 0 : index
    %6 = vector.load %arg12[%c0_5, %c0_6] : memref<64x384xf32, #tpu.memory_space<vmem>>, vector<64x384xf32>
    tpu.vector_store %arg12[%c0_5, %c0_6], %5 {strides = array<i32>} : memref<64x384xf32, #tpu.memory_space<vmem>>, vector<64x384xf32>,
    %c0_7 = arith.constant 0 : index
    %c0_8 = arith.constant 0 : index
    %7 = vector.load %arg2[%c0_7, %c0_8] : memref<8x1xi32, #tpu.memory_space<vmem>>, vector<8x1xi32>
    %c0_9 = arith.constant 0 : index
    %c0_10 = arith.constant 0 : index
    %8 = vector.load %arg6[%c0_9, %c0_10] : memref<1x128xf32, #tpu.memory_space<vmem>>, vector<1x128xf32>
    %c0_11 = arith.constant 0 : index
    %c0_12 = arith.constant 0 : index
    %9 = vector.load %arg4[%c0_11, %c0_12] : memref<128x384xf32, #tpu.memory_space<vmem>>, vector<128x384xf32>
    %cst_13 = arith.constant 0.000000e+00 : f32
    %10 = vector.broadcast %cst_13 : f32 to vector<8x128xf32>
    %c0_i32 = arith.constant 0 : i32
    %c8_i32 = arith.constant 8 : i32
    %11 = arith.muli %c0_i32, %c8_i32 : i32
    %12 = tpu.assume_multiple %11, 8 : i32
    %13 = arith.index_cast %12 : i32 to index
    %c0_14 = arith.constant 0 : index
    %14 = vector.load %arg12[%13, %c0_14] : memref<64x384xf32, #tpu.memory_space<vmem>>, vector<8x384xf32>
    %cst_15 = arith.constant dense<0.000000e+00> : vector<8x384xf32>
    %15 = tpu.matmul %10, %9, %cst_15 {dimension_numbers = #tpu.dot_dimension_numbers<[1], [0], [0], [1], [0, 0, 1, 1], [], []>} : vector<8x128xf32>, vector<128x384xf32>, vector<8x384xf32> -> vector<8x384xf32>
    %16 = vector.extract_strided_slice %14 {offsets = [0, 0], sizes = [8, 128], strides = [1, 1]} : vector<8x384xf32> to vector<8x128xf32>
    %17 = vector.extract_strided_slice %15 {offsets = [0, 0], sizes = [8, 128], strides = [1, 1]} : vector<8x384xf32> to vector<8x128xf32>
    %18 = arith.addf %16, %17 : vector<8x128xf32>
    %19 = arith.negf %18 : vector<8x128xf32>
    %20 = math.exp %19 : vector<8x128xf32>
    %cst_16 = arith.constant 1.000000e+00 : f32
    %21 = vector.broadcast %cst_16 : f32 to vector<8x128xf32>
    %22 = arith.addf %21, %20 : vector<8x128xf32>
    %23 = arith.divf %21, %22 : vector<8x128xf32>
    %24 = vector.extract_strided_slice %14 {offsets = [0, 128], sizes = [8, 128], strides = [1, 1]} : vector<8x384xf32> to vector<8x128xf32>
    %25 = vector.extract_strided_slice %15 {offsets = [0, 128], sizes = [8, 128], strides = [1, 1]} : vector<8x384xf32> to vector<8x128xf32>
    %26 = arith.addf %24, %25 : vector<8x128xf32>
    %27 = arith.negf %26 : vector<8x128xf32>
    %28 = math.exp %27 : vector<8x128xf32>
    %cst_17 = arith.constant 1.000000e+00 : f32
    %29 = vector.broadcast %cst_17 : f32 to vector<8x128xf32>
    %30 = arith.addf %29, %28 : vector<8x128xf32>
    %31 = arith.divf %29, %30 : vector<8x128xf32>
    %32 = vector.extract_strided_slice %14 {offsets = [0, 256], sizes = [8, 128], strides = [1, 1]} : vector<8x384xf32> to vector<8x128xf32>
    %33 = vector.extract_strided_slice %15 {offsets = [0, 256], sizes = [8, 128], strides = [1, 1]} : vector<8x384xf32> to vector<8x128xf32>
    %34 = vector.broadcast %8 : vector<1x128xf32> to vector<8x128xf32>
    %35 = arith.addf %33, %34 : vector<8x128xf32>
    %36 = arith.mulf %23, %35 : vector<8x128xf32>
    %37 = arith.addf %32, %36 : vector<8x128xf32>
    %38 = math.tanh %37 : vector<8x128xf32>
    %cst_18 = arith.constant 1.000000e+00 : f32
    %39 = vector.broadcast %cst_18 : f32 to vector<8x128xf32>
    %40 = arith.subf %39, %31 : vector<8x128xf32>
    %41 = arith.mulf %40, %38 : vector<8x128xf32>
    %42 = arith.mulf %31, %10 : vector<8x128xf32>
    %43 = arith.addf %41, %42 : vector<8x128xf32>
    %c1_i32 = arith.constant 1 : i32
    %44 = arith.addi %c0_i32, %c1_i32 : i32
    %45 = vector.broadcast %44 : i32 to vector<8x1xi32>
    %46 = arith.cmpi eq, %7, %45 : vector<8x1xi32>
    %47 = vector.shape_cast %46 : vector<8x1xi1> to vector<8x1xi1>
    %48 = vector.broadcast %47 : vector<8x1xi1> to vector<8x128xi1>
    %49 = arith.select %48, %43, %10 : vector<8x128xi1>, vector<8x128xf32>
    %c1_i32_19 = arith.constant 1 : i32
    %c8_i32_20 = arith.constant 8 : i32
    %50 = arith.muli %c1_i32_19, %c8_i32_20 : i32
    %51 = tpu.assume_multiple %50, 8 : i32
    %52 = arith.index_cast %51 : i32 to index
    %c0_21 = arith.constant 0 : index
    %53 = vector.load %arg12[%52, %c0_21] : memref<64x384xf32, #tpu.memory_space<vmem>>, vector<8x384xf32>
    %cst_22 = arith.constant dense<0.000000e+00> : vector<8x384xf32>
    %54 = tpu.matmul %43, %9, %cst_22 {dimension_numbers = #tpu.dot_dimension_numbers<[1], [0], [0], [1], [0, 0, 1, 1], [], []>} : vector<8x128xf32>, vector<128x384xf32>, vector<8x384xf32> -> vector<8x384xf32>
    %55 = vector.extract_strided_slice %53 {offsets = [0, 0], sizes = [8, 128], strides = [1, 1]} : vector<8x384xf32> to vector<8x128xf32>
    %56 = vector.extract_strided_slice %54 {offsets = [0, 0], sizes = [8, 128], strides = [1, 1]} : vector<8x384xf32> to vector<8x128xf32>
    %57 = arith.addf %55, %56 : vector<8x128xf32>
    %58 = arith.negf %57 : vector<8x128xf32>
    %59 = math.exp %58 : vector<8x128xf32>
    %cst_23 = arith.constant 1.000000e+00 : f32
    %60 = vector.broadcast %cst_23 : f32 to vector<8x128xf32>
    %61 = arith.addf %60, %59 : vector<8x128xf32>
    %62 = arith.divf %60, %61 : vector<8x128xf32>
    %63 = vector.extract_strided_slice %53 {offsets = [0, 128], sizes = [8, 128], strides = [1, 1]} : vector<8x384xf32> to vector<8x128xf32>
    %64 = vector.extract_strided_slice %54 {offsets = [0, 128], sizes = [8, 128], strides = [1, 1]} : vector<8x384xf32> to vector<8x128xf32>
    %65 = arith.addf %63, %64 : vector<8x128xf32>
    %66 = arith.negf %65 : vector<8x128xf32>
    %67 = math.exp %66 : vector<8x128xf32>
    %cst_24 = arith.constant 1.000000e+00 : f32
    %68 = vector.broadcast %cst_24 : f32 to vector<8x128xf32>
    %69 = arith.addf %68, %67 : vector<8x128xf32>
    %70 = arith.divf %68, %69 : vector<8x128xf32>
    %71 = vector.extract_strided_slice %53 {offsets = [0, 256], sizes = [8, 128], strides = [1, 1]} : vector<8x384xf32> to vector<8x128xf32>
    %72 = vector.extract_strided_slice %54 {offsets = [0, 256], sizes = [8, 128], strides = [1, 1]} : vector<8x384xf32> to vector<8x128xf32>
    %73 = vector.broadcast %8 : vector<1x128xf32> to vector<8x128xf32>
    %74 = arith.addf %72, %73 : vector<8x128xf32>
    %75 = arith.mulf %62, %74 : vector<8x128xf32>
    %76 = arith.addf %71, %75 : vector<8x128xf32>
    %77 = math.tanh %76 : vector<8x128xf32>
    %cst_25 = arith.constant 1.000000e+00 : f32
    %78 = vector.broadcast %cst_25 : f32 to vector<8x128xf32>
    %79 = arith.subf %78, %70 : vector<8x128xf32>
    %80 = arith.mulf %79, %77 : vector<8x128xf32>
    %81 = arith.mulf %70, %43 : vector<8x128xf32>
    %82 = arith.addf %80, %81 : vector<8x128xf32>
    %c1_i32_26 = arith.constant 1 : i32
    %83 = arith.addi %c1_i32_19, %c1_i32_26 : i32
    %84 = vector.broadcast %83 : i32 to vector<8x1xi32>
    %85 = arith.cmpi eq, %7, %84 : vector<8x1xi32>
    %86 = vector.shape_cast %85 : vector<8x1xi1> to vector<8x1xi1>
    %87 = vector.broadcast %86 : vector<8x1xi1> to vector<8x128xi1>
    %88 = arith.select %87, %82, %49 : vector<8x128xi1>, vector<8x128xf32>
    %c2_i32 = arith.constant 2 : i32
    %c8_i32_27 = arith.constant 8 : i32
    %89 = arith.muli %c2_i32, %c8_i32_27 : i32
    %90 = tpu.assume_multiple %89, 8 : i32
    %91 = arith.index_cast %90 : i32 to index
    %c0_28 = arith.constant 0 : index
    %92 = vector.load %arg12[%91, %c0_28] : memref<64x384xf32, #tpu.memory_space<vmem>>, vector<8x384xf32>
    %cst_29 = arith.constant dense<0.000000e+00> : vector<8x384xf32>
    %93 = tpu.matmul %82, %9, %cst_29 {dimension_numbers = #tpu.dot_dimension_numbers<[1], [0], [0], [1], [0, 0, 1, 1], [], []>} : vector<8x128xf32>, vector<128x384xf32>, vector<8x384xf32> -> vector<8x384xf32>
    %94 = vector.extract_strided_slice %92 {offsets = [0, 0], sizes = [8, 128], strides = [1, 1]} : vector<8x384xf32> to vector<8x128xf32>
    %95 = vector.extract_strided_slice %93 {offsets = [0, 0], sizes = [8, 128], strides = [1, 1]} : vector<8x384xf32> to vector<8x128xf32>
    %96 = arith.addf %94, %95 : vector<8x128xf32>
    %97 = arith.negf %96 : vector<8x128xf32>
    %98 = math.exp %97 : vector<8x128xf32>
    %cst_30 = arith.constant 1.000000e+00 : f32
    %99 = vector.broadcast %cst_30 : f32 to vector<8x128xf32>
    %100 = arith.addf %99, %98 : vector<8x128xf32>
    %101 = arith.divf %99, %100 : vector<8x128xf32>
    %102 = vector.extract_strided_slice %92 {offsets = [0, 128], sizes = [8, 128], strides = [1, 1]} : vector<8x384xf32> to vector<8x128xf32>
    %103 = vector.extract_strided_slice %93 {offsets = [0, 128], sizes = [8, 128], strides = [1, 1]} : vector<8x384xf32> to vector<8x128xf32>
    %104 = arith.addf %102, %103 : vector<8x128xf32>
    %105 = arith.negf %104 : vector<8x128xf32>
    %106 = math.exp %105 : vector<8x128xf32>
    %cst_31 = arith.constant 1.000000e+00 : f32
    %107 = vector.broadcast %cst_31 : f32 to vector<8x128xf32>
    %108 = arith.addf %107, %106 : vector<8x128xf32>
    %109 = arith.divf %107, %108 : vector<8x128xf32>
    %110 = vector.extract_strided_slice %92 {offsets = [0, 256], sizes = [8, 128], strides = [1, 1]} : vector<8x384xf32> to vector<8x128xf32>
    %111 = vector.extract_strided_slice %93 {offsets = [0, 256], sizes = [8, 128], strides = [1, 1]} : vector<8x384xf32> to vector<8x128xf32>
    %112 = vector.broadcast %8 : vector<1x128xf32> to vector<8x128xf32>
    %113 = arith.addf %111, %112 : vector<8x128xf32>
    %114 = arith.mulf %101, %113 : vector<8x128xf32>
    %115 = arith.addf %110, %114 : vector<8x128xf32>
    %116 = math.tanh %115 : vector<8x128xf32>
    %cst_32 = arith.constant 1.000000e+00 : f32
    %117 = vector.broadcast %cst_32 : f32 to vector<8x128xf32>
    %118 = arith.subf %117, %109 : vector<8x128xf32>
    %119 = arith.mulf %118, %116 : vector<8x128xf32>
    %120 = arith.mulf %109, %82 : vector<8x128xf32>
    %121 = arith.addf %119, %120 : vector<8x128xf32>
    %c1_i32_33 = arith.constant 1 : i32
    %122 = arith.addi %c2_i32, %c1_i32_33 : i32
    %123 = vector.broadcast %122 : i32 to vector<8x1xi32>
    %124 = arith.cmpi eq, %7, %123 : vector<8x1xi32>
    %125 = vector.shape_cast %124 : vector<8x1xi1> to vector<8x1xi1>
    %126 = vector.broadcast %125 : vector<8x1xi1> to vector<8x128xi1>
    %127 = arith.select %126, %121, %88 : vector<8x128xi1>, vector<8x128xf32>
    %c3_i32 = arith.constant 3 : i32
    %c8_i32_34 = arith.constant 8 : i32
    %128 = arith.muli %c3_i32, %c8_i32_34 : i32
    %129 = tpu.assume_multiple %128, 8 : i32
    %130 = arith.index_cast %129 : i32 to index
    %c0_35 = arith.constant 0 : index
    %131 = vector.load %arg12[%130, %c0_35] : memref<64x384xf32, #tpu.memory_space<vmem>>, vector<8x384xf32>
    %cst_36 = arith.constant dense<0.000000e+00> : vector<8x384xf32>
    %132 = tpu.matmul %121, %9, %cst_36 {dimension_numbers = #tpu.dot_dimension_numbers<[1], [0], [0], [1], [0, 0, 1, 1], [], []>} : vector<8x128xf32>, vector<128x384xf32>, vector<8x384xf32> -> vector<8x384xf32>
    %133 = vector.extract_strided_slice %131 {offsets = [0, 0], sizes = [8, 128], strides = [1, 1]} : vector<8x384xf32> to vector<8x128xf32>
    %134 = vector.extract_strided_slice %132 {offsets = [0, 0], sizes = [8, 128], strides = [1, 1]} : vector<8x384xf32> to vector<8x128xf32>
    %135 = arith.addf %133, %134 : vector<8x128xf32>
    %136 = arith.negf %135 : vector<8x128xf32>
    %137 = math.exp %136 : vector<8x128xf32>
    %cst_37 = arith.constant 1.000000e+00 : f32
    %138 = vector.broadcast %cst_37 : f32 to vector<8x128xf32>
    %139 = arith.addf %138, %137 : vector<8x128xf32>
    %140 = arith.divf %138, %139 : vector<8x128xf32>
    %141 = vector.extract_strided_slice %131 {offsets = [0, 128], sizes = [8, 128], strides = [1, 1]} : vector<8x384xf32> to vector<8x128xf32>
    %142 = vector.extract_strided_slice %132 {offsets = [0, 128], sizes = [8, 128], strides = [1, 1]} : vector<8x384xf32> to vector<8x128xf32>
    %143 = arith.addf %141, %142 : vector<8x128xf32>
    %144 = arith.negf %143 : vector<8x128xf32>
    %145 = math.exp %144 : vector<8x128xf32>
    %cst_38 = arith.constant 1.000000e+00 : f32
    %146 = vector.broadcast %cst_38 : f32 to vector<8x128xf32>
    %147 = arith.addf %146, %145 : vector<8x128xf32>
    %148 = arith.divf %146, %147 : vector<8x128xf32>
    %149 = vector.extract_strided_slice %131 {offsets = [0, 256], sizes = [8, 128], strides = [1, 1]} : vector<8x384xf32> to vector<8x128xf32>
    %150 = vector.extract_strided_slice %132 {offsets = [0, 256], sizes = [8, 128], strides = [1, 1]} : vector<8x384xf32> to vector<8x128xf32>
    %151 = vector.broadcast %8 : vector<1x128xf32> to vector<8x128xf32>
    %152 = arith.addf %150, %151 : vector<8x128xf32>
    %153 = arith.mulf %140, %152 : vector<8x128xf32>
    %154 = arith.addf %149, %153 : vector<8x128xf32>
    %155 = math.tanh %154 : vector<8x128xf32>
    %cst_39 = arith.constant 1.000000e+00 : f32
    %156 = vector.broadcast %cst_39 : f32 to vector<8x128xf32>
    %157 = arith.subf %156, %148 : vector<8x128xf32>
    %158 = arith.mulf %157, %155 : vector<8x128xf32>
    %159 = arith.mulf %148, %121 : vector<8x128xf32>
    %160 = arith.addf %158, %159 : vector<8x128xf32>
    %c1_i32_40 = arith.constant 1 : i32
    %161 = arith.addi %c3_i32, %c1_i32_40 : i32
    %162 = vector.broadcast %161 : i32 to vector<8x1xi32>
    %163 = arith.cmpi eq, %7, %162 : vector<8x1xi32>
    %164 = vector.shape_cast %163 : vector<8x1xi1> to vector<8x1xi1>
    %165 = vector.broadcast %164 : vector<8x1xi1> to vector<8x128xi1>
    %166 = arith.select %165, %160, %127 : vector<8x128xi1>, vector<8x128xf32>
    %c4_i32 = arith.constant 4 : i32
    %c8_i32_41 = arith.constant 8 : i32
    %167 = arith.muli %c4_i32, %c8_i32_41 : i32
    %168 = tpu.assume_multiple %167, 8 : i32
    %169 = arith.index_cast %168 : i32 to index
    %c0_42 = arith.constant 0 : index
    %170 = vector.load %arg12[%169, %c0_42] : memref<64x384xf32, #tpu.memory_space<vmem>>, vector<8x384xf32>
    %cst_43 = arith.constant dense<0.000000e+00> : vector<8x384xf32>
    %171 = tpu.matmul %160, %9, %cst_43 {dimension_numbers = #tpu.dot_dimension_numbers<[1], [0], [0], [1], [0, 0, 1, 1], [], []>} : vector<8x128xf32>, vector<128x384xf32>, vector<8x384xf32> -> vector<8x384xf32>
    %172 = vector.extract_strided_slice %170 {offsets = [0, 0], sizes = [8, 128], strides = [1, 1]} : vector<8x384xf32> to vector<8x128xf32>
    %173 = vector.extract_strided_slice %171 {offsets = [0, 0], sizes = [8, 128], strides = [1, 1]} : vector<8x384xf32> to vector<8x128xf32>
    %174 = arith.addf %172, %173 : vector<8x128xf32>
    %175 = arith.negf %174 : vector<8x128xf32>
    %176 = math.exp %175 : vector<8x128xf32>
    %cst_44 = arith.constant 1.000000e+00 : f32
    %177 = vector.broadcast %cst_44 : f32 to vector<8x128xf32>
    %178 = arith.addf %177, %176 : vector<8x128xf32>
    %179 = arith.divf %177, %178 : vector<8x128xf32>
    %180 = vector.extract_strided_slice %170 {offsets = [0, 128], sizes = [8, 128], strides = [1, 1]} : vector<8x384xf32> to vector<8x128xf32>
    %181 = vector.extract_strided_slice %171 {offsets = [0, 128], sizes = [8, 128], strides = [1, 1]} : vector<8x384xf32> to vector<8x128xf32>
    %182 = arith.addf %180, %181 : vector<8x128xf32>
    %183 = arith.negf %182 : vector<8x128xf32>
    %184 = math.exp %183 : vector<8x128xf32>
    %cst_45 = arith.constant 1.000000e+00 : f32
    %185 = vector.broadcast %cst_45 : f32 to vector<8x128xf32>
    %186 = arith.addf %185, %184 : vector<8x128xf32>
    %187 = arith.divf %185, %186 : vector<8x128xf32>
    %188 = vector.extract_strided_slice %170 {offsets = [0, 256], sizes = [8, 128], strides = [1, 1]} : vector<8x384xf32> to vector<8x128xf32>
    %189 = vector.extract_strided_slice %171 {offsets = [0, 256], sizes = [8, 128], strides = [1, 1]} : vector<8x384xf32> to vector<8x128xf32>
    %190 = vector.broadcast %8 : vector<1x128xf32> to vector<8x128xf32>
    %191 = arith.addf %189, %190 : vector<8x128xf32>
    %192 = arith.mulf %179, %191 : vector<8x128xf32>
    %193 = arith.addf %188, %192 : vector<8x128xf32>
    %194 = math.tanh %193 : vector<8x128xf32>
    %cst_46 = arith.constant 1.000000e+00 : f32
    %195 = vector.broadcast %cst_46 : f32 to vector<8x128xf32>
    %196 = arith.subf %195, %187 : vector<8x128xf32>
    %197 = arith.mulf %196, %194 : vector<8x128xf32>
    %198 = arith.mulf %187, %160 : vector<8x128xf32>
    %199 = arith.addf %197, %198 : vector<8x128xf32>
    %c1_i32_47 = arith.constant 1 : i32
    %200 = arith.addi %c4_i32, %c1_i32_47 : i32
    %201 = vector.broadcast %200 : i32 to vector<8x1xi32>
    %202 = arith.cmpi eq, %7, %201 : vector<8x1xi32>
    %203 = vector.shape_cast %202 : vector<8x1xi1> to vector<8x1xi1>
    %204 = vector.broadcast %203 : vector<8x1xi1> to vector<8x128xi1>
    %205 = arith.select %204, %199, %166 : vector<8x128xi1>, vector<8x128xf32>
    %c5_i32 = arith.constant 5 : i32
    %c8_i32_48 = arith.constant 8 : i32
    %206 = arith.muli %c5_i32, %c8_i32_48 : i32
    %207 = tpu.assume_multiple %206, 8 : i32
    %208 = arith.index_cast %207 : i32 to index
    %c0_49 = arith.constant 0 : index
    %209 = vector.load %arg12[%208, %c0_49] : memref<64x384xf32, #tpu.memory_space<vmem>>, vector<8x384xf32>
    %cst_50 = arith.constant dense<0.000000e+00> : vector<8x384xf32>
    %210 = tpu.matmul %199, %9, %cst_50 {dimension_numbers = #tpu.dot_dimension_numbers<[1], [0], [0], [1], [0, 0, 1, 1], [], []>} : vector<8x128xf32>, vector<128x384xf32>, vector<8x384xf32> -> vector<8x384xf32>
    %211 = vector.extract_strided_slice %209 {offsets = [0, 0], sizes = [8, 128], strides = [1, 1]} : vector<8x384xf32> to vector<8x128xf32>
    %212 = vector.extract_strided_slice %210 {offsets = [0, 0], sizes = [8, 128], strides = [1, 1]} : vector<8x384xf32> to vector<8x128xf32>
    %213 = arith.addf %211, %212 : vector<8x128xf32>
    %214 = arith.negf %213 : vector<8x128xf32>
    %215 = math.exp %214 : vector<8x128xf32>
    %cst_51 = arith.constant 1.000000e+00 : f32
    %216 = vector.broadcast %cst_51 : f32 to vector<8x128xf32>
    %217 = arith.addf %216, %215 : vector<8x128xf32>
    %218 = arith.divf %216, %217 : vector<8x128xf32>
    %219 = vector.extract_strided_slice %209 {offsets = [0, 128], sizes = [8, 128], strides = [1, 1]} : vector<8x384xf32> to vector<8x128xf32>
    %220 = vector.extract_strided_slice %210 {offsets = [0, 128], sizes = [8, 128], strides = [1, 1]} : vector<8x384xf32> to vector<8x128xf32>
    %221 = arith.addf %219, %220 : vector<8x128xf32>
    %222 = arith.negf %221 : vector<8x128xf32>
    %223 = math.exp %222 : vector<8x128xf32>
    %cst_52 = arith.constant 1.000000e+00 : f32
    %224 = vector.broadcast %cst_52 : f32 to vector<8x128xf32>
    %225 = arith.addf %224, %223 : vector<8x128xf32>
    %226 = arith.divf %224, %225 : vector<8x128xf32>
    %227 = vector.extract_strided_slice %209 {offsets = [0, 256], sizes = [8, 128], strides = [1, 1]} : vector<8x384xf32> to vector<8x128xf32>
    %228 = vector.extract_strided_slice %210 {offsets = [0, 256], sizes = [8, 128], strides = [1, 1]} : vector<8x384xf32> to vector<8x128xf32>
    %229 = vector.broadcast %8 : vector<1x128xf32> to vector<8x128xf32>
    %230 = arith.addf %228, %229 : vector<8x128xf32>
    %231 = arith.mulf %218, %230 : vector<8x128xf32>
    %232 = arith.addf %227, %231 : vector<8x128xf32>
    %233 = math.tanh %232 : vector<8x128xf32>
    %cst_53 = arith.constant 1.000000e+00 : f32
    %234 = vector.broadcast %cst_53 : f32 to vector<8x128xf32>
    %235 = arith.subf %234, %226 : vector<8x128xf32>
    %236 = arith.mulf %235, %233 : vector<8x128xf32>
    %237 = arith.mulf %226, %199 : vector<8x128xf32>
    %238 = arith.addf %236, %237 : vector<8x128xf32>
    %c1_i32_54 = arith.constant 1 : i32
    %239 = arith.addi %c5_i32, %c1_i32_54 : i32
    %240 = vector.broadcast %239 : i32 to vector<8x1xi32>
    %241 = arith.cmpi eq, %7, %240 : vector<8x1xi32>
    %242 = vector.shape_cast %241 : vector<8x1xi1> to vector<8x1xi1>
    %243 = vector.broadcast %242 : vector<8x1xi1> to vector<8x128xi1>
    %244 = arith.select %243, %238, %205 : vector<8x128xi1>, vector<8x128xf32>
    %c6_i32 = arith.constant 6 : i32
    %c8_i32_55 = arith.constant 8 : i32
    %245 = arith.muli %c6_i32, %c8_i32_55 : i32
    %246 = tpu.assume_multiple %245, 8 : i32
    %247 = arith.index_cast %246 : i32 to index
    %c0_56 = arith.constant 0 : index
    %248 = vector.load %arg12[%247, %c0_56] : memref<64x384xf32, #tpu.memory_space<vmem>>, vector<8x384xf32>
    %cst_57 = arith.constant dense<0.000000e+00> : vector<8x384xf32>
    %249 = tpu.matmul %238, %9, %cst_57 {dimension_numbers = #tpu.dot_dimension_numbers<[1], [0], [0], [1], [0, 0, 1, 1], [], []>} : vector<8x128xf32>, vector<128x384xf32>, vector<8x384xf32> -> vector<8x384xf32>
    %250 = vector.extract_strided_slice %248 {offsets = [0, 0], sizes = [8, 128], strides = [1, 1]} : vector<8x384xf32> to vector<8x128xf32>
    %251 = vector.extract_strided_slice %249 {offsets = [0, 0], sizes = [8, 128], strides = [1, 1]} : vector<8x384xf32> to vector<8x128xf32>
    %252 = arith.addf %250, %251 : vector<8x128xf32>
    %253 = arith.negf %252 : vector<8x128xf32>
    %254 = math.exp %253 : vector<8x128xf32>
    %cst_58 = arith.constant 1.000000e+00 : f32
    %255 = vector.broadcast %cst_58 : f32 to vector<8x128xf32>
    %256 = arith.addf %255, %254 : vector<8x128xf32>
    %257 = arith.divf %255, %256 : vector<8x128xf32>
    %258 = vector.extract_strided_slice %248 {offsets = [0, 128], sizes = [8, 128], strides = [1, 1]} : vector<8x384xf32> to vector<8x128xf32>
    %259 = vector.extract_strided_slice %249 {offsets = [0, 128], sizes = [8, 128], strides = [1, 1]} : vector<8x384xf32> to vector<8x128xf32>
    %260 = arith.addf %258, %259 : vector<8x128xf32>
    %261 = arith.negf %260 : vector<8x128xf32>
    %262 = math.exp %261 : vector<8x128xf32>
    %cst_59 = arith.constant 1.000000e+00 : f32
    %263 = vector.broadcast %cst_59 : f32 to vector<8x128xf32>
    %264 = arith.addf %263, %262 : vector<8x128xf32>
    %265 = arith.divf %263, %264 : vector<8x128xf32>
    %266 = vector.extract_strided_slice %248 {offsets = [0, 256], sizes = [8, 128], strides = [1, 1]} : vector<8x384xf32> to vector<8x128xf32>
    %267 = vector.extract_strided_slice %249 {offsets = [0, 256], sizes = [8, 128], strides = [1, 1]} : vector<8x384xf32> to vector<8x128xf32>
    %268 = vector.broadcast %8 : vector<1x128xf32> to vector<8x128xf32>
    %269 = arith.addf %267, %268 : vector<8x128xf32>
    %270 = arith.mulf %257, %269 : vector<8x128xf32>
    %271 = arith.addf %266, %270 : vector<8x128xf32>
    %272 = math.tanh %271 : vector<8x128xf32>
    %cst_60 = arith.constant 1.000000e+00 : f32
    %273 = vector.broadcast %cst_60 : f32 to vector<8x128xf32>
    %274 = arith.subf %273, %265 : vector<8x128xf32>
    %275 = arith.mulf %274, %272 : vector<8x128xf32>
    %276 = arith.mulf %265, %238 : vector<8x128xf32>
    %277 = arith.addf %275, %276 : vector<8x128xf32>
    %c1_i32_61 = arith.constant 1 : i32
    %278 = arith.addi %c6_i32, %c1_i32_61 : i32
    %279 = vector.broadcast %278 : i32 to vector<8x1xi32>
    %280 = arith.cmpi eq, %7, %279 : vector<8x1xi32>
    %281 = vector.shape_cast %280 : vector<8x1xi1> to vector<8x1xi1>
    %282 = vector.broadcast %281 : vector<8x1xi1> to vector<8x128xi1>
    %283 = arith.select %282, %277, %244 : vector<8x128xi1>, vector<8x128xf32>
    %c7_i32 = arith.constant 7 : i32
    %c8_i32_62 = arith.constant 8 : i32
    %284 = arith.muli %c7_i32, %c8_i32_62 : i32
    %285 = tpu.assume_multiple %284, 8 : i32
    %286 = arith.index_cast %285 : i32 to index
    %c0_63 = arith.constant 0 : index
    %287 = vector.load %arg12[%286, %c0_63] : memref<64x384xf32, #tpu.memory_space<vmem>>, vector<8x384xf32>
    %cst_64 = arith.constant dense<0.000000e+00> : vector<8x384xf32>
    %288 = tpu.matmul %277, %9, %cst_64 {dimension_numbers = #tpu.dot_dimension_numbers<[1], [0], [0], [1], [0, 0, 1, 1], [], []>} : vector<8x128xf32>, vector<128x384xf32>, vector<8x384xf32> -> vector<8x384xf32>
    %289 = vector.extract_strided_slice %287 {offsets = [0, 0], sizes = [8, 128], strides = [1, 1]} : vector<8x384xf32> to vector<8x128xf32>
    %290 = vector.extract_strided_slice %288 {offsets = [0, 0], sizes = [8, 128], strides = [1, 1]} : vector<8x384xf32> to vector<8x128xf32>
    %291 = arith.addf %289, %290 : vector<8x128xf32>
    %292 = arith.negf %291 : vector<8x128xf32>
    %293 = math.exp %292 : vector<8x128xf32>
    %cst_65 = arith.constant 1.000000e+00 : f32
    %294 = vector.broadcast %cst_65 : f32 to vector<8x128xf32>
    %295 = arith.addf %294, %293 : vector<8x128xf32>
    %296 = arith.divf %294, %295 : vector<8x128xf32>
    %297 = vector.extract_strided_slice %287 {offsets = [0, 128], sizes = [8, 128], strides = [1, 1]} : vector<8x384xf32> to vector<8x128xf32>
    %298 = vector.extract_strided_slice %288 {offsets = [0, 128], sizes = [8, 128], strides = [1, 1]} : vector<8x384xf32> to vector<8x128xf32>
    %299 = arith.addf %297, %298 : vector<8x128xf32>
    %300 = arith.negf %299 : vector<8x128xf32>
    %301 = math.exp %300 : vector<8x128xf32>
    %cst_66 = arith.constant 1.000000e+00 : f32
    %302 = vector.broadcast %cst_66 : f32 to vector<8x128xf32>
    %303 = arith.addf %302, %301 : vector<8x128xf32>
    %304 = arith.divf %302, %303 : vector<8x128xf32>
    %305 = vector.extract_strided_slice %287 {offsets = [0, 256], sizes = [8, 128], strides = [1, 1]} : vector<8x384xf32> to vector<8x128xf32>
    %306 = vector.extract_strided_slice %288 {offsets = [0, 256], sizes = [8, 128], strides = [1, 1]} : vector<8x384xf32> to vector<8x128xf32>
    %307 = vector.broadcast %8 : vector<1x128xf32> to vector<8x128xf32>
    %308 = arith.addf %306, %307 : vector<8x128xf32>
    %309 = arith.mulf %296, %308 : vector<8x128xf32>
    %310 = arith.addf %305, %309 : vector<8x128xf32>
    %311 = math.tanh %310 : vector<8x128xf32>
    %cst_67 = arith.constant 1.000000e+00 : f32
    %312 = vector.broadcast %cst_67 : f32 to vector<8x128xf32>
    %313 = arith.subf %312, %304 : vector<8x128xf32>
    %314 = arith.mulf %313, %311 : vector<8x128xf32>
    %315 = arith.mulf %304, %277 : vector<8x128xf32>
    %316 = arith.addf %314, %315 : vector<8x128xf32>
    %c1_i32_68 = arith.constant 1 : i32
    %317 = arith.addi %c7_i32, %c1_i32_68 : i32
    %318 = vector.broadcast %317 : i32 to vector<8x1xi32>
    %319 = arith.cmpi eq, %7, %318 : vector<8x1xi32>
    %320 = vector.shape_cast %319 : vector<8x1xi1> to vector<8x1xi1>
    %321 = vector.broadcast %320 : vector<8x1xi1> to vector<8x128xi1>
    %322 = arith.select %321, %316, %283 : vector<8x128xi1>, vector<8x128xf32>
    %c8_i32_69 = arith.constant 8 : i32
    %c0_70 = arith.constant 0 : index
    %c0_71 = arith.constant 0 : index
    %323 = vector.load %arg7[%c0_70, %c0_71] : memref<128x128xf32, #tpu.memory_space<vmem>>, vector<128x128xf32>
    %cst_72 = arith.constant dense<0.000000e+00> : vector<8x128xf32>
    %324 = tpu.matmul %322, %323, %cst_72 {dimension_numbers = #tpu.dot_dimension_numbers<[1], [0], [0], [1], [0, 0, 1, 1], [], []>} : vector<8x128xf32>, vector<128x128xf32>, vector<8x128xf32> -> vector<8x128xf32>
    %c0_73 = arith.constant 0 : index
    %c0_74 = arith.constant 0 : index
    %325 = vector.load %arg8[%c0_73, %c0_74] : memref<1x128xf32, #tpu.memory_space<vmem>>, vector<1x128xf32>
    %326 = vector.broadcast %325 : vector<1x128xf32> to vector<8x128xf32>
    %327 = arith.addf %324, %326 : vector<8x128xf32>
    %cst_75 = arith.constant 0.000000e+00 : f32
    %328 = vector.broadcast %cst_75 : f32 to vector<8x128xf32>
    %329 = arith.maximumf %327, %328 : vector<8x128xf32>
    %c0_76 = arith.constant 0 : index
    %c0_77 = arith.constant 0 : index
    %330 = vector.load %arg9[%c0_76, %c0_77] : memref<128x128xf32, #tpu.memory_space<vmem>>, vector<128x128xf32>
    %cst_78 = arith.constant dense<0.000000e+00> : vector<8x128xf32>
    %331 = tpu.matmul %329, %330, %cst_78 {dimension_numbers = #tpu.dot_dimension_numbers<[1], [0], [0], [1], [0, 0, 1, 1], [], []>} : vector<8x128xf32>, vector<128x128xf32>, vector<8x128xf32> -> vector<8x128xf32>
    %c0_79 = arith.constant 0 : index
    %c0_80 = arith.constant 0 : index
    %332 = vector.load %arg10[%c0_79, %c0_80] : memref<1x128xf32, #tpu.memory_space<vmem>>, vector<1x128xf32>
    %333 = vector.broadcast %332 : vector<1x128xf32> to vector<8x128xf32>
    %334 = arith.addf %331, %333 : vector<8x128xf32>
    %335 = arith.negf %334 : vector<8x128xf32>
    %336 = math.exp %335 : vector<8x128xf32>
    %cst_81 = arith.constant 1.000000e+00 : f32
    %337 = vector.broadcast %cst_81 : f32 to vector<8x128xf32>
    %338 = arith.addf %337, %336 : vector<8x128xf32>
    %339 = arith.divf %337, %338 : vector<8x128xf32>
    %cst_82 = arith.constant 9.99999997E-7 : f32
    %cst_83 = arith.constant 0.999998986 : f32
    %340 = vector.broadcast %cst_82 : f32 to vector<8x128xf32>
    %341 = arith.maximumf %340, %339 : vector<8x128xf32>
    %342 = vector.broadcast %cst_83 : f32 to vector<8x128xf32>
    %343 = arith.minimumf %342, %341 : vector<8x128xf32>
    %c0_84 = arith.constant 0 : index
    %c0_85 = arith.constant 0 : index
    %344 = vector.load %arg11[%c0_84, %c0_85] : memref<8x128xf32, #tpu.memory_space<vmem>>, vector<8x128xf32>
    tpu.vector_store %arg11[%c0_84, %c0_85], %343 {strides = array<i32>} : memref<8x128xf32, #tpu.memory_space<vmem>>, vector<8x128xf32>,
    return
  }
  func.func @transform_0(%arg0: i32) -> (i32, i32) {
    %c0_i32 = arith.constant 0 : i32
    %c0_i32_0 = arith.constant 0 : i32
    %c0_i32_1 = arith.constant 0 : i32
    return %c0_i32, %c0_i32_0 : i32, i32
  }
  func.func @transform_1(%arg0: i32) -> (i32, i32) {
    %c0_i32 = arith.constant 0 : i32
    %c0_i32_0 = arith.constant 0 : i32
    %c0_i32_1 = arith.constant 0 : i32
    return %c0_i32, %c0_i32_0 : i32, i32
  }
  func.func @transform_2(%arg0: i32) -> (i32, i32) {
    %c0_i32 = arith.constant 0 : i32
    %c0_i32_0 = arith.constant 0 : i32
    %c0_i32_1 = arith.constant 0 : i32
    return %c0_i32, %c0_i32_0 : i32, i32
  }
  func.func @transform_3(%arg0: i32) -> (i32, i32) {
    %c0_i32 = arith.constant 0 : i32
    %c0_i32_0 = arith.constant 0 : i32
    %c0_i32_1 = arith.constant 0 : i32
    return %c0_i32, %c0_i32_0 : i32, i32
  }
  func.func @transform_4(%arg0: i32) -> (i32, i32) {
    %c0_i32 = arith.constant 0 : i32
    %c0_i32_0 = arith.constant 0 : i32
    %c0_i32_1 = arith.constant 0 : i32
    return %c0_i32, %c0_i32_0 : i32, i32
  }
  func.func @transform_5(%arg0: i32) -> (i32, i32) {
    %c0_i32 = arith.constant 0 : i32
    %c0_i32_0 = arith.constant 0 : i32
    %c0_i32_1 = arith.constant 0 : i32
    return %c0_i32, %c0_i32_0 : i32, i32
  }
  func.func @transform_6(%arg0: i32) -> (i32, i32) {
    %c0_i32 = arith.constant 0 : i32
    %c0_i32_0 = arith.constant 0 : i32
    %c0_i32_1 = arith.constant 0 : i32
    return %c0_i32, %c0_i32_0 : i32, i32
  }
  func.func @transform_7(%arg0: i32) -> (i32, i32) {
    %c0_i32 = arith.constant 0 : i32
    %c0_i32_0 = arith.constant 0 : i32
    %c0_i32_1 = arith.constant 0 : i32
    return %c0_i32, %c0_i32_0 : i32, i32
  }
  func.func @transform_8(%arg0: i32) -> (i32, i32) {
    %c0_i32 = arith.constant 0 : i32
    %c0_i32_0 = arith.constant 0 : i32
    %c0_i32_1 = arith.constant 0 : i32
    return %c0_i32, %c0_i32_0 : i32, i32
  }
  func.func @transform_9(%arg0: i32) -> (i32, i32) {
    %c0_i32 = arith.constant 0 : i32
    %c0_i32_0 = arith.constant 0 : i32
    %c0_i32_1 = arith.constant 0 : i32
    return %c0_i32, %c0_i32_0 : i32, i32
  }
  func.func @transform_10(%arg0: i32) -> (i32, i32) {
    %c0_i32 = arith.constant 0 : i32
    %c0_i32_0 = arith.constant 0 : i32
    %c0_i32_1 = arith.constant 0 : i32
    return %c0_i32, %c0_i32_0 : i32, i32
  }
}

</mosaic_0001>

<llo_original>
// kernel: vnet_forward.1
$region0: #{vnet_forward.1}
  #allocation0 [shape = 'u32[]', space=smem, size = 0x4, offset = 0x4, fixed_abs, tag = 'smem constant byte address 0x4 - core index']
  #allocation1 [shape = 'u32[144,128]{1,0:T(1,128)}', space=vmem, size = 0x12000, scoped, tag = 'internal scratch']
  #allocation2 [shape = 'f32[64,384]{1,0:T(8,128)}', space=vmem, size = 0x18000, scoped, tag = 'scratch operand']
  %s0 = inlined_call_operand.vmem [shape: f32[64,128], index: 0, kind: input, shape index: {}]
  %s1 = inlined_call_operand.vmem [shape: s32[8,1], index: 1, kind: input, shape index: {}]
  %s2 = inlined_call_operand.hbm [shape: f32[128,384], index: 2, kind: input, shape index: {}]
  %s3 = inlined_call_operand.hbm [shape: f32[128,384], index: 3, kind: input, shape index: {}]
  %s4 = inlined_call_operand.vmem [shape: f32[1,384], index: 4, kind: input, shape index: {}]
  %s5 = inlined_call_operand.vmem [shape: f32[1,128], index: 5, kind: input, shape index: {}]
  %s6 = inlined_call_operand.vmem [shape: f32[128,128], index: 6, kind: input, shape index: {}]
  %s7 = inlined_call_operand.vmem [shape: f32[1,128], index: 7, kind: input, shape index: {}]
  %s8 = inlined_call_operand.vmem [shape: f32[128,128], index: 8, kind: input, shape index: {}]
  %s9 = inlined_call_operand.vmem [shape: f32[1,128], index: 9, kind: input, shape index: {}]
  %s10 = inlined_call_operand.vmem [shape: f32[8,128], index: 10, kind: output, shape index: {}]
  %s11 = sld [smem:[#allocation0]]
  $region58: #{vnet_forward.1} parent=0
    _
  %s13 = ssub.s32 1, %s11
  %s14 = scalar_select 0, %s13, %s11
  $region1: #{vnet_forward.1} parent=0
    #allocation3 [shape = 'u8[196608]{0}', space=vmem, size = 0x30000, scoped, tag = 'input window, operand 2, single buffered']
    #allocation4 [shape = 's32[1]{0}', space=sflag, size = 0x4, scoped, tag = 'scoped memory for vnet_forward.1']
    #allocation5 [shape = 'u8[196608]{0}', space=vmem, size = 0x30000, scoped, tag = 'input window, operand 3, single buffered']
    #allocation6 [shape = 's32[1]{0}', space=sflag, size = 0x4, scoped, tag = 'scoped memory for vnet_forward.1']
    %15 = vsyncpa [#allocation4], 0
    %16 = vsyncpa [#allocation6], 0
    // Predicated region
    $region2: #{vnet_forward.1} parent=1 // pred_check
      _
    $region3: #{vnet_forward.1} parent=1 // pred_check_branch
      %18 = sbr.rel (0) target = $region5
    $region4: #{vnet_forward.1} parent=1 // pred_region
      _
    $region5: #{vnet_forward.1} parent=1 // pred_fallthru
      _
    // Predicated region
    $region6: #{vnet_forward.1} parent=1 // pred_check
      _
    $region7: #{vnet_forward.1} parent=1 // pred_check_branch
      %20 = sbr.rel (0) target = $region9
    $region8: #{vnet_forward.1} parent=1 // pred_region
      _
    $region9: #{vnet_forward.1} parent=1 // pred_fallthru
      _
    // Predicated region
    $region10: #{vnet_forward.1} parent=1 // pred_check
      _
    $region11: #{vnet_forward.1} parent=1 // pred_check_branch
      %22 = sbr.rel (0) target = $region13
    $region12: #{vnet_forward.1} parent=1 // pred_region
      %s24 = ssub.s32 6144, 6144
      %25 = vsyncadd [#allocation4], %s24
      %s26 = sshll.u32 [#allocation3], 4
      %s27 = int_to_ptr.vmem [resolvable:$true] %s26
      %32 = dma.hbm_to_vmem [thread:$0]  %s2, 6144, %s27, [#allocation4], 384, 384, 24
    $region13: #{vnet_forward.1} parent=1 // pred_fallthru
      _
    // Predicated region
    $region14: #{vnet_forward.1} parent=1 // pred_check
      _
    $region15: #{vnet_forward.1} parent=1 // pred_check_branch
      %34 = sbr.rel (0) target = $region17
    $region16: #{vnet_forward.1} parent=1 // pred_region
      %s36 = ssub.s32 6144, 6144
      %37 = vsyncadd [#allocation6], %s36
      %s38 = sshll.u32 [#allocation5], 4
      %s39 = int_to_ptr.vmem [resolvable:$true] %s38
      %44 = dma.hbm_to_vmem [thread:$0]  %s3, 6144, %s39, [#allocation6], 384, 384, 24
    $region17: #{vnet_forward.1} parent=1 // pred_fallthru
      _
    // Predicated region
    $region18: #{vnet_forward.1} parent=1 // pred_check
      _
    $region19: #{vnet_forward.1} parent=1 // pred_check_branch
      %46 = sbr.rel (0) target = $region21
    $region20: #{vnet_forward.1} parent=1 // pred_region
      _
    $region21: #{vnet_forward.1} parent=1 // pred_fallthru
      _
    // Predicated region
    $region22: #{vnet_forward.1} parent=1 // pred_check
      _
    $region23: #{vnet_forward.1} parent=1 // pred_check_branch
      %48 = sbr.rel (0) target = $region25
    $region24: #{vnet_forward.1} parent=1 // pred_region
      _
    $region25: #{vnet_forward.1} parent=1 // pred_fallthru
      _
    // Predicated region
    $region26: #{vnet_forward.1} parent=1 // pred_check
      _
    $region27: #{vnet_forward.1} parent=1 // pred_check_branch
      %50 = sbr.rel (0) target = $region29
    $region28: #{vnet_forward.1} parent=1 // pred_region
      _
    $region29: #{vnet_forward.1} parent=1 // pred_fallthru
      _
    // Predicated region
    $region30: #{vnet_forward.1} parent=1 // pred_check
      _
    $region31: #{vnet_forward.1} parent=1 // pred_check_branch
      %52 = sbr.rel (0) target = $region33
    $region32: #{vnet_forward.1} parent=1 // pred_region
      _
    $region33: #{vnet_forward.1} parent=1 // pred_fallthru
      _
    // Predicated region
    $region34: #{vnet_forward.1} parent=1 // pred_check
      _
    $region35: #{vnet_forward.1} parent=1 // pred_check_branch
      %54 = sbr.rel (0) target = $region37
    $region36: #{vnet_forward.1} parent=1 // pred_region
      _
    $region37: #{vnet_forward.1} parent=1 // pred_fallthru
      _
    // Predicated region
    $region38: #{vnet_forward.1} parent=1 // pred_check
      _
    $region39: #{vnet_forward.1} parent=1 // pred_check_branch
      %56 = sbr.rel (0) target = $region41
    $region40: #{vnet_forward.1} parent=1 // pred_region
      _
    $region41: #{vnet_forward.1} parent=1 // pred_fallthru
      _
    // Predicated region
    $region42: #{vnet_forward.1} parent=1 // pred_check
      _
    $region43: #{vnet_forward.1} parent=1 // pred_check_branch
      %58 = sbr.rel (0) target = $region45
    $region44: #{vnet_forward.1} parent=1 // pred_region
      %59 = dma.done [#allocation4], 6144
    $region45: #{vnet_forward.1} parent=1 // pred_fallthru
      _
    // Predicated region
    $region46: #{vnet_forward.1} parent=1 // pred_check
      _
    $region47: #{vnet_forward.1} parent=1 // pred_check_branch
      %61 = sbr.rel (0) target = $region49
    $region48: #{vnet_forward.1} parent=1 // pred_region
      %62 = dma.done [#allocation6], 6144
    $region49: #{vnet_forward.1} parent=1 // pred_fallthru
      _
    %v63 = vld [vmem:[%s0] sm:$0xff]
    %v64 = vld [vmem:[%s0 + $0x8] sm:$0xff]
    %v65 = vld [vmem:[%s0 + $0x10] sm:$0xff]
    %v66 = vld [vmem:[%s0 + $0x18] sm:$0xff]
    %v67 = vld [vmem:[%s0 + $0x20] sm:$0xff]
    %v68 = vld [vmem:[%s0 + $0x28] sm:$0xff]
    %v69 = vld [vmem:[%s0 + $0x30] sm:$0xff]
    %v70 = vld [vmem:[%s0 + $0x38] sm:$0xff]
    %v71 = vld [vmem:[#allocation3] sm:$0xff]
    %v72 = vld [vmem:[#allocation3 + $0x8] sm:$0xff]
    %v73 = vld [vmem:[#allocation3 + $0x10] sm:$0xff]
    %v74 = vld [vmem:[#allocation3 + $0x18] sm:$0xff]
    %v75 = vld [vmem:[#allocation3 + $0x20] sm:$0xff]
    %v76 = vld [vmem:[#allocation3 + $0x28] sm:$0xff]
    %v77 = vld [vmem:[#allocation3 + $0x30] sm:$0xff]
    %v78 = vld [vmem:[#allocation3 + $0x38] sm:$0xff]
    %v79 = vld [vmem:[#allocation3 + $0x40] sm:$0xff]
    %v80 = vld [vmem:[#allocation3 + $0x48] sm:$0xff]
    %v81 = vld [vmem:[#allocation3 + $0x50] sm:$0xff]
    %v82 = vld [vmem:[#allocation3 + $0x58] sm:$0xff]
    %v83 = vld [vmem:[#allocation3 + $0x60] sm:$0xff]
    %v84 = vld [vmem:[#allocation3 + $0x68] sm:$0xff]
    %v85 = vld [vmem:[#allocation3 + $0x70] sm:$0xff]
    %v86 = vld [vmem:[#allocation3 + $0x78] sm:$0xff]
    %v87 = vld [vmem:[#allocation3 + $0x80] sm:$0xff]
    %v88 = vld [vmem:[#allocation3 + $0x88] sm:$0xff]
    %v89 = vld [vmem:[#allocation3 + $0x90] sm:$0xff]
    %v90 = vld [vmem:[#allocation3 + $0x98] sm:$0xff]
    %v91 = vld [vmem:[#allocation3 + $0xa0] sm:$0xff]
    %v92 = vld [vmem:[#allocation3 + $0xa8] sm:$0xff]
    %v93 = vld [vmem:[#allocation3 + $0xb0] sm:$0xff]
    %v94 = vld [vmem:[#allocation3 + $0xb8] sm:$0xff]
    %v95 = vld [vmem:[#allocation3 + $0xc0] sm:$0xff]
    %v96 = vld [vmem:[#allocation3 + $0xc8] sm:$0xff]
    %v97 = vld [vmem:[#allocation3 + $0xd0] sm:$0xff]
    %v98 = vld [vmem:[#allocation3 + $0xd8] sm:$0xff]
    %v99 = vld [vmem:[#allocation3 + $0xe0] sm:$0xff]
    %v100 = vld [vmem:[#allocation3 + $0xe8] sm:$0xff]
    %v101 = vld [vmem:[#allocation3 + $0xf0] sm:$0xff]
    %v102 = vld [vmem:[#allocation3 + $0xf8] sm:$0xff]
    %v103 = vld [vmem:[#allocation3 + $0x100] sm:$0xff]
    %v104 = vld [vmem:[#allocation3 + $0x108] sm:$0xff]
    %v105 = vld [vmem:[#allocation3 + $0x110] sm:$0xff]
    %v106 = vld [vmem:[#allocation3 + $0x118] sm:$0xff]
    %v107 = vld [vmem:[#allocation3 + $0x120] sm:$0xff]
    %v108 = vld [vmem:[#allocation3 + $0x128] sm:$0xff]
    %v109 = vld [vmem:[#allocation3 + $0x130] sm:$0xff]
    %v110 = vld [vmem:[#allocation3 + $0x138] sm:$0xff]
    %v111 = vld [vmem:[#allocation3 + $0x140] sm:$0xff]
    %v112 = vld [vmem:[#allocation3 + $0x148] sm:$0xff]
    %v113 = vld [vmem:[#allocation3 + $0x150] sm:$0xff]
    %v114 = vld [vmem:[#allocation3 + $0x158] sm:$0xff]
    %v115 = vld [vmem:[#allocation3 + $0x160] sm:$0xff]
    %v116 = vld [vmem:[#allocation3 + $0x168] sm:$0xff]
    %v117 = vld [vmem:[#allocation3 + $0x170] sm:$0xff]
    %v118 = vld [vmem:[#allocation3 + $0x178] sm:$0xff]
    %v119 = vld [vmem:[%s4] sm:$0x7]
    %v121 = vlaneseq
    %v122 = vshrl.u32 %v121, 7
    %v123 = vsub.s32 0, %v122
    %v124 = vrot.slane %v119, %v123
    %v125 = vlaneseq
    %v126 = vshrl.u32 %v125, 7
    %v127 = vsub.s32 1, %v126
    %v128 = vrot.slane %v119, %v127
    %v129 = vlaneseq
    %v130 = vshrl.u32 %v129, 7
    %v131 = vsub.s32 2, %v130
    %v132 = vrot.slane %v119, %v131
    %136 = vmatprep.subr.mxu0 %v72
    %137 = vmatpush1.msra.mxu0 %v71
    %138 = vmatprep.subr.mxu0 %v75
    %139 = vmatpush1.msra.mxu0 %v74
    %140 = vmatprep.subr.mxu0 %v78
    %141 = vmatpush1.msra.mxu0 %v77
    %142 = vmatprep.subr.mxu0 %v81
    %143 = vmatpush1.msra.mxu0 %v80
    %144 = vmatprep.subr.mxu0 %v84
    %145 = vmatpush1.msra.mxu0 %v83
    %146 = vmatprep.subr.mxu0 %v87
    %147 = vmatpush1.msra.mxu0 %v86
    %148 = vmatprep.subr.mxu0 %v90
    %149 = vmatpush1.msra.mxu0 %v89
    %150 = vmatprep.subr.mxu0 %v93
    %151 = vmatpush1.msra.mxu0 %v92
    %152 = vmatprep.subr.mxu0 %v96
    %153 = vmatpush1.msra.mxu0 %v95
    %154 = vmatprep.subr.mxu0 %v99
    %155 = vmatpush1.msra.mxu0 %v98
    %156 = vmatprep.subr.mxu0 %v102
    %157 = vmatpush1.msra.mxu0 %v101
    %158 = vmatprep.subr.mxu0 %v105
    %159 = vmatpush1.msra.mxu0 %v104
    %160 = vmatprep.subr.mxu0 %v108
    %161 = vmatpush1.msra.mxu0 %v107
    %162 = vmatprep.subr.mxu0 %v111
    %163 = vmatpush1.msra.mxu0 %v110
    %164 = vmatprep.subr.mxu0 %v114
    %165 = vmatpush1.msra.mxu0 %v113
    %166 = vmatprep.subr.mxu0 %v117
    %167 = vmatpush1.msra.mxu0 %v116
    %168 = vmatprep.subr.mxu0 0.0
    %169 = vmatpush1.msra.mxu0 0.0
    %170 = vmatprep.subr.mxu0 0.0
    %171 = vmatpush1.msra.mxu0 0.0
    %172 = vmatprep.subr.mxu0 0.0
    %173 = vmatpush1.msra.mxu0 0.0
    %174 = vmatprep.subr.mxu0 0.0
    %175 = vmatpush1.msra.mxu0 0.0
    %176 = vmatprep.subr.mxu0 0.0
    %177 = vmatpush1.msra.mxu0 0.0
    %178 = vmatprep.subr.mxu0 0.0
    %179 = vmatpush1.msra.mxu0 0.0
    %180 = vmatprep.subr.mxu0 0.0
    %181 = vmatpush1.msra.mxu0 0.0
    %182 = vmatprep.subr.mxu0 0.0
    %183 = vmatpush1.msra.mxu0 0.0
    %184 = vmatprep.subr.mxu0 0.0
    %185 = vmatpush1.msra.mxu0 0.0
    %186 = vmatprep.subr.mxu0 0.0
    %187 = vmatpush1.msra.mxu0 0.0
    %188 = vmatprep.subr.mxu0 0.0
    %189 = vmatpush1.msra.mxu0 0.0
    %190 = vmatprep.subr.mxu0 0.0
    %191 = vmatpush1.msra.mxu0 0.0
    %192 = vmatprep.subr.mxu0 0.0
    %193 = vmatpush1.msra.mxu0 0.0
    %194 = vmatprep.subr.mxu0 0.0
    %195 = vmatpush1.msra.mxu0 0.0
    %196 = vmatprep.subr.mxu0 0.0
    %197 = vmatpush1.msra.mxu0 0.0
    %198 = vmatprep.subr.mxu0 0.0
    %199 = vmatpush1.msra.mxu0 0.0
    %200 = vmatprep.mubr.f32.mxu0 0.0
    %201 = vmatmul.mubr.f32.gmra.mrb[0].mxu0 %v63
    %v202 = vpop.f32.mrb[0].mxu0
    %v203 = vadd.f32 %v124, %v202
    %v204 = vpop.f32.mrb[0].mxu0
    %v205 = vadd.f32 %v128, %v204
    %206 = vmatprep.mubr.f32.mxu0 0.0
    %207 = vmatmul.mubr.f32.gmra.mrb[0].mxu0 %v64
    %v208 = vpop.f32.mrb[0].mxu0
    %v209 = vadd.f32 %v124, %v208
    %v210 = vpop.f32.mrb[0].mxu0
    %v211 = vadd.f32 %v128, %v210
    %212 = vmatprep.mubr.f32.mxu0 0.0
    %213 = vmatmul.mubr.f32.gmra.mrb[0].mxu0 %v65
    %v214 = vpop.f32.mrb[0].mxu0
    %v215 = vadd.f32 %v124, %v214
    %v216 = vpop.f32.mrb[0].mxu0
    %v217 = vadd.f32 %v128, %v216
    %218 = vmatprep.mubr.f32.mxu0 0.0
    %219 = vmatmul.mubr.f32.gmra.mrb[0].mxu0 %v66
    %v220 = vpop.f32.mrb[0].mxu0
    %v221 = vadd.f32 %v124, %v220
    %v222 = vpop.f32.mrb[0].mxu0
    %v223 = vadd.f32 %v128, %v222
    %224 = vmatprep.mubr.f32.mxu0 0.0
    %225 = vmatmul.mubr.f32.gmra.mrb[0].mxu0 %v67
    %v226 = vpop.f32.mrb[0].mxu0
    %v227 = vadd.f32 %v124, %v226
    %v228 = vpop.f32.mrb[0].mxu0
    %v229 = vadd.f32 %v128, %v228
    %230 = vmatprep.mubr.f32.mxu0 0.0
    %231 = vmatmul.mubr.f32.gmra.mrb[0].mxu0 %v68
    %v232 = vpop.f32.mrb[0].mxu0
    %v233 = vadd.f32 %v124, %v232
    %v234 = vpop.f32.mrb[0].mxu0
    %v235 = vadd.f32 %v128, %v234
    %236 = vmatprep.mubr.f32.mxu0 0.0
    %237 = vmatmul.mubr.f32.gmra.mrb[0].mxu0 %v69
    %v238 = vpop.f32.mrb[0].mxu0
    %v239 = vadd.f32 %v124, %v238
    %v240 = vpop.f32.mrb[0].mxu0
    %v241 = vadd.f32 %v128, %v240
    %242 = vmatprep.mubr.f32.mxu0 0.0
    %243 = vmatmul.mubr.f32.gmra.mrb[0].mxu0 %v70
    %v244 = vpop.f32.mrb[0].mxu0
    %v245 = vadd.f32 %v124, %v244
    %v246 = vpop.f32.mrb[0].mxu0
    %v247 = vadd.f32 %v128, %v246
    %248 = vdwg.mxu0
    %249 = vmatprep.subr.mxu0 0.0
    %250 = vmatpush1.msra.mxu0 %v73
    %251 = vmatprep.subr.mxu0 0.0
    %252 = vmatpush1.msra.mxu0 %v76
    %253 = vmatprep.subr.mxu0 0.0
    %254 = vmatpush1.msra.mxu0 %v79
    %255 = vmatprep.subr.mxu0 0.0
    %256 = vmatpush1.msra.mxu0 %v82
    %257 = vmatprep.subr.mxu0 0.0
    %258 = vmatpush1.msra.mxu0 %v85
    %259 = vmatprep.subr.mxu0 0.0
    %260 = vmatpush1.msra.mxu0 %v88
    %261 = vmatprep.subr.mxu0 0.0
    %262 = vmatpush1.msra.mxu0 %v91
    %263 = vmatprep.subr.mxu0 0.0
    %264 = vmatpush1.msra.mxu0 %v94
    %265 = vmatprep.subr.mxu0 0.0
    %266 = vmatpush1.msra.mxu0 %v97
    %267 = vmatprep.subr.mxu0 0.0
    %268 = vmatpush1.msra.mxu0 %v100
    %269 = vmatprep.subr.mxu0 0.0
    %270 = vmatpush1.msra.mxu0 %v103
    %271 = vmatprep.subr.mxu0 0.0
    %272 = vmatpush1.msra.mxu0 %v106
    %273 = vmatprep.subr.mxu0 0.0
    %274 = vmatpush1.msra.mxu0 %v109
    %275 = vmatprep.subr.mxu0 0.0
    %276 = vmatpush1.msra.mxu0 %v112
    %277 = vmatprep.subr.mxu0 0.0
    %278 = vmatpush1.msra.mxu0 %v115
    %279 = vmatprep.subr.mxu0 0.0
    %280 = vmatpush1.msra.mxu0 %v118
    %281 = vmatprep.subr.mxu0 0.0
    %282 = vmatpush1.msra.mxu0 0.0
    %283 = vmatprep.subr.mxu0 0.0
    %284 = vmatpush1.msra.mxu0 0.0
    %285 = vmatprep.subr.mxu0 0.0
    %286 = vmatpush1.msra.mxu0 0.0
    %287 = vmatprep.subr.mxu0 0.0
    %288 = vmatpush1.msra.mxu0 0.0
    %289 = vmatprep.subr.mxu0 0.0
    %290 = vmatpush1.msra.mxu0 0.0
    %291 = vmatprep.subr.mxu0 0.0
    %292 = vmatpush1.msra.mxu0 0.0
    %293 = vmatprep.subr.mxu0 0.0
    %294 = vmatpush1.msra.mxu0 0.0
    %295 = vmatprep.subr.mxu0 0.0
    %296 = vmatpush1.msra.mxu0 0.0
    %297 = vmatprep.subr.mxu0 0.0
    %298 = vmatpush1.msra.mxu0 0.0
    %299 = vmatprep.subr.mxu0 0.0
    %300 = vmatpush1.msra.mxu0 0.0
    %301 = vmatprep.subr.mxu0 0.0
    %302 = vmatpush1.msra.mxu0 0.0
    %303 = vmatprep.subr.mxu0 0.0
    %304 = vmatpush1.msra.mxu0 0.0
    %305 = vmatprep.subr.mxu0 0.0
    %306 = vmatpush1.msra.mxu0 0.0
    %307 = vmatprep.subr.mxu0 0.0
    %308 = vmatpush1.msra.mxu0 0.0
    %309 = vmatprep.subr.mxu0 0.0
    %310 = vmatpush1.msra.mxu0 0.0
    %311 = vmatprep.subr.mxu0 0.0
    %312 = vmatpush1.msra.mxu0 0.0
    %313 = vmatprep.mubr.f32.mxu0 0.0
    %314 = vmatmul.mubr.f32.gmra.mrb[0].mxu0 %v63
    %v315 = vpop.f32.mrb[0].mxu0
    %v316 = vadd.f32 %v132, %v315
    %v317 = vpop.f32.mrb[0].mxu0
    %318 = vmatprep.mubr.f32.mxu0 0.0
    %319 = vmatmul.mubr.f32.gmra.mrb[0].mxu0 %v64
    %v320 = vpop.f32.mrb[0].mxu0
    %v321 = vadd.f32 %v132, %v320
    %v322 = vpop.f32.mrb[0].mxu0
    %323 = vmatprep.mubr.f32.mxu0 0.0
    %324 = vmatmul.mubr.f32.gmra.mrb[0].mxu0 %v65
    %v325 = vpop.f32.mrb[0].mxu0
    %v326 = vadd.f32 %v132, %v325
    %v327 = vpop.f32.mrb[0].mxu0
    %328 = vmatprep.mubr.f32.mxu0 0.0
    %329 = vmatmul.mubr.f32.gmra.mrb[0].mxu0 %v66
    %v330 = vpop.f32.mrb[0].mxu0
    %v331 = vadd.f32 %v132, %v330
    %v332 = vpop.f32.mrb[0].mxu0
    %333 = vmatprep.mubr.f32.mxu0 0.0
    %334 = vmatmul.mubr.f32.gmra.mrb[0].mxu0 %v67
    %v335 = vpop.f32.mrb[0].mxu0
    %v336 = vadd.f32 %v132, %v335
    %v337 = vpop.f32.mrb[0].mxu0
    %338 = vmatprep.mubr.f32.mxu0 0.0
    %339 = vmatmul.mubr.f32.gmra.mrb[0].mxu0 %v68
    %v340 = vpop.f32.mrb[0].mxu0
    %v341 = vadd.f32 %v132, %v340
    %v342 = vpop.f32.mrb[0].mxu0
    %343 = vmatprep.mubr.f32.mxu0 0.0
    %344 = vmatmul.mubr.f32.gmra.mrb[0].mxu0 %v69
    %v345 = vpop.f32.mrb[0].mxu0
    %v346 = vadd.f32 %v132, %v345
    %v347 = vpop.f32.mrb[0].mxu0
    %348 = vmatprep.mubr.f32.mxu0 0.0
    %349 = vmatmul.mubr.f32.gmra.mrb[0].mxu0 %v70
    %v350 = vpop.f32.mrb[0].mxu0
    %v351 = vadd.f32 %v132, %v350
    %v352 = vpop.f32.mrb[0].mxu0
    %353 = vdwg.mxu0
    %354 = vst [vmem:[#allocation2] sm:$0xff] %v203
    %355 = vst [vmem:[#allocation2 + $0x8] sm:$0xff] %v205
    %356 = vst [vmem:[#allocation2 + $0x10] sm:$0xff] %v316
    %357 = vst [vmem:[#allocation2 + $0x18] sm:$0xff] %v209
    %358 = vst [vmem:[#allocation2 + $0x20] sm:$0xff] %v211
    %359 = vst [vmem:[#allocation2 + $0x28] sm:$0xff] %v321
    %360 = vst [vmem:[#allocation2 + $0x30] sm:$0xff] %v215
    %361 = vst [vmem:[#allocation2 + $0x38] sm:$0xff] %v217
    %362 = vst [vmem:[#allocation2 + $0x40] sm:$0xff] %v326
    %363 = vst [vmem:[#allocation2 + $0x48] sm:$0xff] %v221
    %364 = vst [vmem:[#allocation2 + $0x50] sm:$0xff] %v223
    %365 = vst [vmem:[#allocation2 + $0x58] sm:$0xff] %v331
    %366 = vst [vmem:[#allocation2 + $0x60] sm:$0xff] %v227
    %367 = vst [vmem:[#allocation2 + $0x68] sm:$0xff] %v229
    %368 = vst [vmem:[#allocation2 + $0x70] sm:$0xff] %v336
    %369 = vst [vmem:[#allocation2 + $0x78] sm:$0xff] %v233
    %370 = vst [vmem:[#allocation2 + $0x80] sm:$0xff] %v235
    %371 = vst [vmem:[#allocation2 + $0x88] sm:$0xff] %v341
    %372 = vst [vmem:[#allocation2 + $0x90] sm:$0xff] %v239
    %373 = vst [vmem:[#allocation2 + $0x98] sm:$0xff] %v241
    %374 = vst [vmem:[#allocation2 + $0xa0] sm:$0xff] %v346
    %375 = vst [vmem:[#allocation2 + $0xa8] sm:$0xff] %v245
    %376 = vst [vmem:[#allocation2 + $0xb0] sm:$0xff] %v247
    %377 = vst [vmem:[#allocation2 + $0xb8] sm:$0xff] %v351
    %v378 = vld [vmem:[%s1] sm:$0xff]
    %v379 = vld [vmem:[%s5] sm:$0x1]
    %v380 = vld [vmem:[#allocation5] sm:$0xff]
    %v381 = vld [vmem:[#allocation5 + $0x8] sm:$0xff]
    %v382 = vld [vmem:[#allocation5 + $0x10] sm:$0xff]
    %v383 = vld [vmem:[#allocation5 + $0x18] sm:$0xff]
    %v384 = vld [vmem:[#allocation5 + $0x20] sm:$0xff]
    %v385 = vld [vmem:[#allocation5 + $0x28] sm:$0xff]
    %v386 = vld [vmem:[#allocation5 + $0x30] sm:$0xff]
    %v387 = vld [vmem:[#allocation5 + $0x38] sm:$0xff]
    %v388 = vld [vmem:[#allocation5 + $0x40] sm:$0xff]
    %v389 = vld [vmem:[#allocation5 + $0x48] sm:$0xff]
    %v390 = vld [vmem:[#allocation5 + $0x50] sm:$0xff]
    %v391 = vld [vmem:[#allocation5 + $0x58] sm:$0xff]
    %v392 = vld [vmem:[#allocation5 + $0x60] sm:$0xff]
    %v393 = vld [vmem:[#allocation5 + $0x68] sm:$0xff]
    %v394 = vld [vmem:[#allocation5 + $0x70] sm:$0xff]
    %v395 = vld [vmem:[#allocation5 + $0x78] sm:$0xff]
    %v396 = vld [vmem:[#allocation5 + $0x80] sm:$0xff]
    %v397 = vld [vmem:[#allocation5 + $0x88] sm:$0xff]
    %v398 = vld [vmem:[#allocation5 + $0x90] sm:$0xff]
    %v399 = vld [vmem:[#allocation5 + $0x98] sm:$0xff]
    %v400 = vld [vmem:[#allocation5 + $0xa0] sm:$0xff]
    %v401 = vld [vmem:[#allocation5 + $0xa8] sm:$0xff]
    %v402 = vld [vmem:[#allocation5 + $0xb0] sm:$0xff]
    %v403 = vld [vmem:[#allocation5 + $0xb8] sm:$0xff]
    %v404 = vld [vmem:[#allocation5 + $0xc0] sm:$0xff]
    %v405 = vld [vmem:[#allocation5 + $0xc8] sm:$0xff]
    %v406 = vld [vmem:[#allocation5 + $0xd0] sm:$0xff]
    %v407 = vld [vmem:[#allocation5 + $0xd8] sm:$0xff]
    %v408 = vld [vmem:[#allocation5 + $0xe0] sm:$0xff]
    %v409 = vld [vmem:[#allocation5 + $0xe8] sm:$0xff]
    %v410 = vld [vmem:[#allocation5 + $0xf0] sm:$0xff]
    %v411 = vld [vmem:[#allocation5 + $0xf8] sm:$0xff]
    %v412 = vld [vmem:[#allocation5 + $0x100] sm:$0xff]
    %v413 = vld [vmem:[#allocation5 + $0x108] sm:$0xff]
    %v414 = vld [vmem:[#allocation5 + $0x110] sm:$0xff]
    %v415 = vld [vmem:[#allocation5 + $0x118] sm:$0xff]
    %v416 = vld [vmem:[#allocation5 + $0x120] sm:$0xff]
    %v417 = vld [vmem:[#allocation5 + $0x128] sm:$0xff]
    %v418 = vld [vmem:[#allocation5 + $0x130] sm:$0xff]
    %v419 = vld [vmem:[#allocation5 + $0x138] sm:$0xff]
    %v420 = vld [vmem:[#allocation5 + $0x140] sm:$0xff]
    %v421 = vld [vmem:[#allocation5 + $0x148] sm:$0xff]
    %v422 = vld [vmem:[#allocation5 + $0x150] sm:$0xff]
    %v423 = vld [vmem:[#allocation5 + $0x158] sm:$0xff]
    %v424 = vld [vmem:[#allocation5 + $0x160] sm:$0xff]
    %v425 = vld [vmem:[#allocation5 + $0x168] sm:$0xff]
    %v426 = vld [vmem:[#allocation5 + $0x170] sm:$0xff]
    %v427 = vld [vmem:[#allocation5 + $0x178] sm:$0xff]
    %s428 = smul.u32 0, 3
    %s429 = smul.addr %s428, 8
    %s430 = scalar_lea.vmem [#allocation2], %s429
    %v431 = vld [vmem:[%s430] sm:$0xff]
    %v432 = vld [vmem:[%s430 + $0x8] sm:$0xff]
    %v433 = vld [vmem:[%s430 + $0x10] sm:$0xff]
    %434 = vmatprep.subr.mxu0 %v381
    %435 = vmatpush1.msra.mxu0 %v380
    %436 = vmatprep.subr.mxu0 %v384
    %437 = vmatpush1.msra.mxu0 %v383
    %438 = vmatprep.subr.mxu0 %v387
    %439 = vmatpush1.msra.mxu0 %v386
    %440 = vmatprep.subr.mxu0 %v390
    %441 = vmatpush1.msra.mxu0 %v389
    %442 = vmatprep.subr.mxu0 %v393
    %443 = vmatpush1.msra.mxu0 %v392
    %444 = vmatprep.subr.mxu0 %v396
    %445 = vmatpush1.msra.mxu0 %v395
    %446 = vmatprep.subr.mxu0 %v399
    %447 = vmatpush1.msra.mxu0 %v398
    %448 = vmatprep.subr.mxu0 %v402
    %449 = vmatpush1.msra.mxu0 %v401
    %450 = vmatprep.subr.mxu0 %v405
    %451 = vmatpush1.msra.mxu0 %v404
    %452 = vmatprep.subr.mxu0 %v408
    %453 = vmatpush1.msra.mxu0 %v407
    %454 = vmatprep.subr.mxu0 %v411
    %455 = vmatpush1.msra.mxu0 %v410
    %456 = vmatprep.subr.mxu0 %v414
    %457 = vmatpush1.msra.mxu0 %v413
    %458 = vmatprep.subr.mxu0 %v417
    %459 = vmatpush1.msra.mxu0 %v416
    %460 = vmatprep.subr.mxu0 %v420
    %461 = vmatpush1.msra.mxu0 %v419
    %462 = vmatprep.subr.mxu0 %v423
    %463 = vmatpush1.msra.mxu0 %v422
    %464 = vmatprep.subr.mxu0 %v426
    %465 = vmatpush1.msra.mxu0 %v425
    %466 = vmatprep.subr.mxu0 0.0
    %467 = vmatpush1.msra.mxu0 0.0
    %468 = vmatprep.subr.mxu0 0.0
    %469 = vmatpush1.msra.mxu0 0.0
    %470 = vmatprep.subr.mxu0 0.0
    %471 = vmatpush1.msra.mxu0 0.0
    %472 = vmatprep.subr.mxu0 0.0
    %473 = vmatpush1.msra.mxu0 0.0
    %474 = vmatprep.subr.mxu0 0.0
    %475 = vmatpush1.msra.mxu0 0.0
    %476 = vmatprep.subr.mxu0 0.0
    %477 = vmatpush1.msra.mxu0 0.0
    %478 = vmatprep.subr.mxu0 0.0
    %479 = vmatpush1.msra.mxu0 0.0
    %480 = vmatprep.subr.mxu0 0.0
    %481 = vmatpush1.msra.mxu0 0.0
    %482 = vmatprep.subr.mxu0 0.0
    %483 = vmatpush1.msra.mxu0 0.0
    %484 = vmatprep.subr.mxu0 0.0
    %485 = vmatpush1.msra.mxu0 0.0
    %486 = vmatprep.subr.mxu0 0.0
    %487 = vmatpush1.msra.mxu0 0.0
    %488 = vmatprep.subr.mxu0 0.0
    %489 = vmatpush1.msra.mxu0 0.0
    %490 = vmatprep.subr.mxu0 0.0
    %491 = vmatpush1.msra.mxu0 0.0
    %492 = vmatprep.subr.mxu0 0.0
    %493 = vmatpush1.msra.mxu0 0.0
    %494 = vmatprep.subr.mxu0 0.0
    %495 = vmatpush1.msra.mxu0 0.0
    %496 = vmatprep.subr.mxu0 0.0
    %497 = vmatpush1.msra.mxu0 0.0
    %498 = vmatprep.mubr.f32.mxu0 0.0
    %499 = vmatmul.mubr.f32.gmra.mrb[0].mxu0 0.0
    %v500 = vpop.f32.mrb[0].mxu0
    %v501 = vadd.f32 0.0, %v500
    %v502 = vpop.f32.mrb[0].mxu0
    %v503 = vadd.f32 0.0, %v502
    %504 = vdwg.mxu0
    %505 = vmatprep.subr.mxu0 0.0
    %506 = vmatpush1.msra.mxu0 %v382
    %507 = vmatprep.subr.mxu0 0.0
    %508 = vmatpush1.msra.mxu0 %v385
    %509 = vmatprep.subr.mxu0 0.0
    %510 = vmatpush1.msra.mxu0 %v388
    %511 = vmatprep.subr.mxu0 0.0
    %512 = vmatpush1.msra.mxu0 %v391
    %513 = vmatprep.subr.mxu0 0.0
    %514 = vmatpush1.msra.mxu0 %v394
    %515 = vmatprep.subr.mxu0 0.0
    %516 = vmatpush1.msra.mxu0 %v397
    %517 = vmatprep.subr.mxu0 0.0
    %518 = vmatpush1.msra.mxu0 %v400
    %519 = vmatprep.subr.mxu0 0.0
    %520 = vmatpush1.msra.mxu0 %v403
    %521 = vmatprep.subr.mxu0 0.0
    %522 = vmatpush1.msra.mxu0 %v406
    %523 = vmatprep.subr.mxu0 0.0
    %524 = vmatpush1.msra.mxu0 %v409
    %525 = vmatprep.subr.mxu0 0.0
    %526 = vmatpush1.msra.mxu0 %v412
    %527 = vmatprep.subr.mxu0 0.0
    %528 = vmatpush1.msra.mxu0 %v415
    %529 = vmatprep.subr.mxu0 0.0
    %530 = vmatpush1.msra.mxu0 %v418
    %531 = vmatprep.subr.mxu0 0.0
    %532 = vmatpush1.msra.mxu0 %v421
    %533 = vmatprep.subr.mxu0 0.0
    %534 = vmatpush1.msra.mxu0 %v424
    %535 = vmatprep.subr.mxu0 0.0
    %536 = vmatpush1.msra.mxu0 %v427
    %537 = vmatprep.subr.mxu0 0.0
    %538 = vmatpush1.msra.mxu0 0.0
    %539 = vmatprep.subr.mxu0 0.0
    %540 = vmatpush1.msra.mxu0 0.0
    %541 = vmatprep.subr.mxu0 0.0
    %542 = vmatpush1.msra.mxu0 0.0
    %543 = vmatprep.subr.mxu0 0.0
    %544 = vmatpush1.msra.mxu0 0.0
    %545 = vmatprep.subr.mxu0 0.0
    %546 = vmatpush1.msra.mxu0 0.0
    %547 = vmatprep.subr.mxu0 0.0
    %548 = vmatpush1.msra.mxu0 0.0
    %549 = vmatprep.subr.mxu0 0.0
    %550 = vmatpush1.msra.mxu0 0.0
    %551 = vmatprep.subr.mxu0 0.0
    %552 = vmatpush1.msra.mxu0 0.0
    %553 = vmatprep.subr.mxu0 0.0
    %554 = vmatpush1.msra.mxu0 0.0
    %555 = vmatprep.subr.mxu0 0.0
    %556 = vmatpush1.msra.mxu0 0.0
    %557 = vmatprep.subr.mxu0 0.0
    %558 = vmatpush1.msra.mxu0 0.0
    %559 = vmatprep.subr.mxu0 0.0
    %560 = vmatpush1.msra.mxu0 0.0
    %561 = vmatprep.subr.mxu0 0.0
    %562 = vmatpush1.msra.mxu0 0.0
    %563 = vmatprep.subr.mxu0 0.0
    %564 = vmatpush1.msra.mxu0 0.0
    %565 = vmatprep.subr.mxu0 0.0
    %566 = vmatpush1.msra.mxu0 0.0
    %567 = vmatprep.subr.mxu0 0.0
    %568 = vmatpush1.msra.mxu0 0.0
    %569 = vmatprep.mubr.f32.mxu0 0.0
    %570 = vmatmul.mubr.f32.gmra.mrb[0].mxu0 0.0
    %v571 = vpop.f32.mrb[0].mxu0
    %v572 = vadd.f32 0.0, %v571
    %v573 = vpop.f32.mrb[0].mxu0
    %574 = vdwg.mxu0
    %v575 = vadd.f32 %v431, %v501
    %v576 = vxor.u32 %v575, 2147483648
    %v577 = vmul.f32 %v576, 1.442695
    %v578 = vpow.pop %v577
    %v579 = vadd.f32 %v578, 1.0
    %v580 = vrcp.pop %v579
    %v581 = vmul.f32 1.0, %v580
    %v582 = vadd.f32 %v432, %v503
    %v583 = vxor.u32 %v582, 2147483648
    %v584 = vmul.f32 %v583, 1.442695
    %v585 = vpow.pop %v584
    %v586 = vadd.f32 %v585, 1.0
    %v587 = vrcp.pop %v586
    %v588 = vmul.f32 1.0, %v587
    %v590 = vlaneseq
    %v591 = vshrl.u32 %v590, 7
    %v592 = vsub.s32 0, %v591
    %v593 = vrot.slane %v379, %v592
    %v595 = vadd.f32 %v572, %v593
    %v596 = vmul.f32 %v581, %v595
    %v597 = vadd.f32 %v433, %v596
    %v598 = vtanh.pop %v597
    %v599 = vsub.f32 1.0, %v588
    %v600 = vmul.f32 %v599, %v598
    %v601 = vmul.f32 %v588, 0.0
    %v602 = vadd.f32 %v600, %v601
    %vm603 = vcmp.eq.s32.totalorder %v378, 1
    %v604 = vsel %vm603, 1, 0
    %605 = vset.pattern.permute.xlu0 0
    %606 = vperm.xlu0 %605, %v604
    %v607 = vpop.permute.xlu0 %606
    %vm608 = vcmp.eq.s32.totalorder %v607, 1
    %v609 = vsel %vm608, %v602, 0.0
    %s610 = smul.u32 1, 3
    %s611 = smul.addr %s610, 8
    %s612 = scalar_lea.vmem [#allocation2], %s611
    %v613 = vld [vmem:[%s612] sm:$0xff]
    %v614 = vld [vmem:[%s612 + $0x8] sm:$0xff]
    %v615 = vld [vmem:[%s612 + $0x10] sm:$0xff]
    %616 = vmatprep.subr.mxu0 %v381
    %617 = vmatpush1.msra.mxu0 %v380
    %618 = vmatprep.subr.mxu0 %v384
    %619 = vmatpush1.msra.mxu0 %v383
    %620 = vmatprep.subr.mxu0 %v387
    %621 = vmatpush1.msra.mxu0 %v386
    %622 = vmatprep.subr.mxu0 %v390
    %623 = vmatpush1.msra.mxu0 %v389
    %624 = vmatprep.subr.mxu0 %v393
    %625 = vmatpush1.msra.mxu0 %v392
    %626 = vmatprep.subr.mxu0 %v396
    %627 = vmatpush1.msra.mxu0 %v395
    %628 = vmatprep.subr.mxu0 %v399
    %629 = vmatpush1.msra.mxu0 %v398
    %630 = vmatprep.subr.mxu0 %v402
    %631 = vmatpush1.msra.mxu0 %v401
    %632 = vmatprep.subr.mxu0 %v405
    %633 = vmatpush1.msra.mxu0 %v404
    %634 = vmatprep.subr.mxu0 %v408
    %635 = vmatpush1.msra.mxu0 %v407
    %636 = vmatprep.subr.mxu0 %v411
    %637 = vmatpush1.msra.mxu0 %v410
    %638 = vmatprep.subr.mxu0 %v414
    %639 = vmatpush1.msra.mxu0 %v413
    %640 = vmatprep.subr.mxu0 %v417
    %641 = vmatpush1.msra.mxu0 %v416
    %642 = vmatprep.subr.mxu0 %v420
    %643 = vmatpush1.msra.mxu0 %v419
    %644 = vmatprep.subr.mxu0 %v423
    %645 = vmatpush1.msra.mxu0 %v422
    %646 = vmatprep.subr.mxu0 %v426
    %647 = vmatpush1.msra.mxu0 %v425
    %648 = vmatprep.subr.mxu0 0.0
    %649 = vmatpush1.msra.mxu0 0.0
    %650 = vmatprep.subr.mxu0 0.0
    %651 = vmatpush1.msra.mxu0 0.0
    %652 = vmatprep.subr.mxu0 0.0
    %653 = vmatpush1.msra.mxu0 0.0
    %654 = vmatprep.subr.mxu0 0.0
    %655 = vmatpush1.msra.mxu0 0.0
    %656 = vmatprep.subr.mxu0 0.0
    %657 = vmatpush1.msra.mxu0 0.0
    %658 = vmatprep.subr.mxu0 0.0
    %659 = vmatpush1.msra.mxu0 0.0
    %660 = vmatprep.subr.mxu0 0.0
    %661 = vmatpush1.msra.mxu0 0.0
    %662 = vmatprep.subr.mxu0 0.0
    %663 = vmatpush1.msra.mxu0 0.0
    %664 = vmatprep.subr.mxu0 0.0
    %665 = vmatpush1.msra.mxu0 0.0
    %666 = vmatprep.subr.mxu0 0.0
    %667 = vmatpush1.msra.mxu0 0.0
    %668 = vmatprep.subr.mxu0 0.0
    %669 = vmatpush1.msra.mxu0 0.0
    %670 = vmatprep.subr.mxu0 0.0
    %671 = vmatpush1.msra.mxu0 0.0
    %672 = vmatprep.subr.mxu0 0.0
    %673 = vmatpush1.msra.mxu0 0.0
    %674 = vmatprep.subr.mxu0 0.0
    %675 = vmatpush1.msra.mxu0 0.0
    %676 = vmatprep.subr.mxu0 0.0
    %677 = vmatpush1.msra.mxu0 0.0
    %678 = vmatprep.subr.mxu0 0.0
    %679 = vmatpush1.msra.mxu0 0.0
    %680 = vmatprep.mubr.f32.mxu0 0.0
    %681 = vmatmul.mubr.f32.gmra.mrb[0].mxu0 %v602
    %v682 = vpop.f32.mrb[0].mxu0
    %v683 = vadd.f32 0.0, %v682
    %v684 = vpop.f32.mrb[0].mxu0
    %v685 = vadd.f32 0.0, %v684
    %686 = vdwg.mxu0
    %687 = vmatprep.subr.mxu0 0.0
    %688 = vmatpush1.msra.mxu0 %v382
    %689 = vmatprep.subr.mxu0 0.0
    %690 = vmatpush1.msra.mxu0 %v385
    %691 = vmatprep.subr.mxu0 0.0
    %692 = vmatpush1.msra.mxu0 %v388
    %693 = vmatprep.subr.mxu0 0.0
    %694 = vmatpush1.msra.mxu0 %v391
    %695 = vmatprep.subr.mxu0 0.0
    %696 = vmatpush1.msra.mxu0 %v394
    %697 = vmatprep.subr.mxu0 0.0
    %698 = vmatpush1.msra.mxu0 %v397
    %699 = vmatprep.subr.mxu0 0.0
    %700 = vmatpush1.msra.mxu0 %v400
    %701 = vmatprep.subr.mxu0 0.0
    %702 = vmatpush1.msra.mxu0 %v403
    %703 = vmatprep.subr.mxu0 0.0
    %704 = vmatpush1.msra.mxu0 %v406
    %705 = vmatprep.subr.mxu0 0.0
    %706 = vmatpush1.msra.mxu0 %v409
    %707 = vmatprep.subr.mxu0 0.0
    %708 = vmatpush1.msra.mxu0 %v412
    %709 = vmatprep.subr.mxu0 0.0
    %710 = vmatpush1.msra.mxu0 %v415
    %711 = vmatprep.subr.mxu0 0.0
    %712 = vmatpush1.msra.mxu0 %v418
    %713 = vmatprep.subr.mxu0 0.0
    %714 = vmatpush1.msra.mxu0 %v421
    %715 = vmatprep.subr.mxu0 0.0
    %716 = vmatpush1.msra.mxu0 %v424
    %717 = vmatprep.subr.mxu0 0.0
    %718 = vmatpush1.msra.mxu0 %v427
    %719 = vmatprep.subr.mxu0 0.0
    %720 = vmatpush1.msra.mxu0 0.0
    %721 = vmatprep.subr.mxu0 0.0
    %722 = vmatpush1.msra.mxu0 0.0
    %723 = vmatprep.subr.mxu0 0.0
    %724 = vmatpush1.msra.mxu0 0.0
    %725 = vmatprep.subr.mxu0 0.0
    %726 = vmatpush1.msra.mxu0 0.0
    %727 = vmatprep.subr.mxu0 0.0
    %728 = vmatpush1.msra.mxu0 0.0
    %729 = vmatprep.subr.mxu0 0.0
    %730 = vmatpush1.msra.mxu0 0.0
    %731 = vmatprep.subr.mxu0 0.0
    %732 = vmatpush1.msra.mxu0 0.0
    %733 = vmatprep.subr.mxu0 0.0
    %734 = vmatpush1.msra.mxu0 0.0
    %735 = vmatprep.subr.mxu0 0.0
    %736 = vmatpush1.msra.mxu0 0.0
    %737 = vmatprep.subr.mxu0 0.0
    %738 = vmatpush1.msra.mxu0 0.0
    %739 = vmatprep.subr.mxu0 0.0
    %740 = vmatpush1.msra.mxu0 0.0
    %741 = vmatprep.subr.mxu0 0.0
    %742 = vmatpush1.msra.mxu0 0.0
    %743 = vmatprep.subr.mxu0 0.0
    %744 = vmatpush1.msra.mxu0 0.0
    %745 = vmatprep.subr.mxu0 0.0
    %746 = vmatpush1.msra.mxu0 0.0
    %747 = vmatprep.subr.mxu0 0.0
    %748 = vmatpush1.msra.mxu0 0.0
    %749 = vmatprep.subr.mxu0 0.0
    %750 = vmatpush1.msra.mxu0 0.0
    %751 = vmatprep.mubr.f32.mxu0 0.0
    %752 = vmatmul.mubr.f32.gmra.mrb[0].mxu0 %v602
    %v753 = vpop.f32.mrb[0].mxu0
    %v754 = vadd.f32 0.0, %v753
    %v755 = vpop.f32.mrb[0].mxu0
    %756 = vdwg.mxu0
    %v757 = vadd.f32 %v613, %v683
    %v758 = vxor.u32 %v757, 2147483648
    %v759 = vmul.f32 %v758, 1.442695
    %v760 = vpow.pop %v759
    %v761 = vadd.f32 %v760, 1.0
    %v762 = vrcp.pop %v761
    %v763 = vmul.f32 1.0, %v762
    %v764 = vadd.f32 %v614, %v685
    %v765 = vxor.u32 %v764, 2147483648
    %v766 = vmul.f32 %v765, 1.442695
    %v767 = vpow.pop %v766
    %v768 = vadd.f32 %v767, 1.0
    %v769 = vrcp.pop %v768
    %v770 = vmul.f32 1.0, %v769
    %v771 = vadd.f32 %v754, %v593
    %v772 = vmul.f32 %v763, %v771
    %v773 = vadd.f32 %v615, %v772
    %v774 = vtanh.pop %v773
    %v775 = vsub.f32 1.0, %v770
    %v776 = vmul.f32 %v775, %v774
    %v777 = vmul.f32 %v770, %v602
    %v778 = vadd.f32 %v776, %v777
    %vm779 = vcmp.eq.s32.totalorder %v378, 2
    %v780 = vsel %vm779, 1, 0
    %781 = vset.pattern.permute.xlu0 0
    %782 = vperm.xlu0 %781, %v780
    %v783 = vpop.permute.xlu0 %782
    %vm784 = vcmp.eq.s32.totalorder %v783, 1
    %v785 = vsel %vm784, %v778, %v609
    %s786 = smul.u32 2, 3
    %s787 = smul.addr %s786, 8
    %s788 = scalar_lea.vmem [#allocation2], %s787
    %v789 = vld [vmem:[%s788] sm:$0xff]
    %v790 = vld [vmem:[%s788 + $0x8] sm:$0xff]
    %v791 = vld [vmem:[%s788 + $0x10] sm:$0xff]
    %792 = vmatprep.subr.mxu0 %v381
    %793 = vmatpush1.msra.mxu0 %v380
    %794 = vmatprep.subr.mxu0 %v384
    %795 = vmatpush1.msra.mxu0 %v383
    %796 = vmatprep.subr.mxu0 %v387
    %797 = vmatpush1.msra.mxu0 %v386
    %798 = vmatprep.subr.mxu0 %v390
    %799 = vmatpush1.msra.mxu0 %v389
    %800 = vmatprep.subr.mxu0 %v393
    %801 = vmatpush1.msra.mxu0 %v392
    %802 = vmatprep.subr.mxu0 %v396
    %803 = vmatpush1.msra.mxu0 %v395
    %804 = vmatprep.subr.mxu0 %v399
    %805 = vmatpush1.msra.mxu0 %v398
    %806 = vmatprep.subr.mxu0 %v402
    %807 = vmatpush1.msra.mxu0 %v401
    %808 = vmatprep.subr.mxu0 %v405
    %809 = vmatpush1.msra.mxu0 %v404
    %810 = vmatprep.subr.mxu0 %v408
    %811 = vmatpush1.msra.mxu0 %v407
    %812 = vmatprep.subr.mxu0 %v411
    %813 = vmatpush1.msra.mxu0 %v410
    %814 = vmatprep.subr.mxu0 %v414
    %815 = vmatpush1.msra.mxu0 %v413
    %816 = vmatprep.subr.mxu0 %v417
    %817 = vmatpush1.msra.mxu0 %v416
    %818 = vmatprep.subr.mxu0 %v420
    %819 = vmatpush1.msra.mxu0 %v419
    %820 = vmatprep.subr.mxu0 %v423
    %821 = vmatpush1.msra.mxu0 %v422
    %822 = vmatprep.subr.mxu0 %v426
    %823 = vmatpush1.msra.mxu0 %v425
    %824 = vmatprep.subr.mxu0 0.0
    %825 = vmatpush1.msra.mxu0 0.0
    %826 = vmatprep.subr.mxu0 0.0
    %827 = vmatpush1.msra.mxu0 0.0
    %828 = vmatprep.subr.mxu0 0.0
    %829 = vmatpush1.msra.mxu0 0.0
    %830 = vmatprep.subr.mxu0 0.0
    %831 = vmatpush1.msra.mxu0 0.0
    %832 = vmatprep.subr.mxu0 0.0
    %833 = vmatpush1.msra.mxu0 0.0
    %834 = vmatprep.subr.mxu0 0.0
    %835 = vmatpush1.msra.mxu0 0.0
    %836 = vmatprep.subr.mxu0 0.0
    %837 = vmatpush1.msra.mxu0 0.0
    %838 = vmatprep.subr.mxu0 0.0
    %839 = vmatpush1.msra.mxu0 0.0
    %840 = vmatprep.subr.mxu0 0.0
    %841 = vmatpush1.msra.mxu0 0.0
    %842 = vmatprep.subr.mxu0 0.0
    %843 = vmatpush1.msra.mxu0 0.0
    %844 = vmatprep.subr.mxu0 0.0
    %845 = vmatpush1.msra.mxu0 0.0
    %846 = vmatprep.subr.mxu0 0.0
    %847 = vmatpush1.msra.mxu0 0.0
    %848 = vmatprep.subr.mxu0 0.0
    %849 = vmatpush1.msra.mxu0 0.0
    %850 = vmatprep.subr.mxu0 0.0
    %851 = vmatpush1.msra.mxu0 0.0
    %852 = vmatprep.subr.mxu0 0.0
    %853 = vmatpush1.msra.mxu0 0.0
    %854 = vmatprep.subr.mxu0 0.0
    %855 = vmatpush1.msra.mxu0 0.0
    %856 = vmatprep.mubr.f32.mxu0 0.0
    %857 = vmatmul.mubr.f32.gmra.mrb[0].mxu0 %v778
    %v858 = vpop.f32.mrb[0].mxu0
    %v859 = vadd.f32 0.0, %v858
    %v860 = vpop.f32.mrb[0].mxu0
    %v861 = vadd.f32 0.0, %v860
    %862 = vdwg.mxu0
    %863 = vmatprep.subr.mxu0 0.0
    %864 = vmatpush1.msra.mxu0 %v382
    %865 = vmatprep.subr.mxu0 0.0
    %866 = vmatpush1.msra.mxu0 %v385
    %867 = vmatprep.subr.mxu0 0.0
    %868 = vmatpush1.msra.mxu0 %v388
    %869 = vmatprep.subr.mxu0 0.0
    %870 = vmatpush1.msra.mxu0 %v391
    %871 = vmatprep.subr.mxu0 0.0
    %872 = vmatpush1.msra.mxu0 %v394
    %873 = vmatprep.subr.mxu0 0.0
    %874 = vmatpush1.msra.mxu0 %v397
    %875 = vmatprep.subr.mxu0 0.0
    %876 = vmatpush1.msra.mxu0 %v400
    %877 = vmatprep.subr.mxu0 0.0
    %878 = vmatpush1.msra.mxu0 %v403
    %879 = vmatprep.subr.mxu0 0.0
    %880 = vmatpush1.msra.mxu0 %v406
    %881 = vmatprep.subr.mxu0 0.0
    %882 = vmatpush1.msra.mxu0 %v409
    %883 = vmatprep.subr.mxu0 0.0
    %884 = vmatpush1.msra.mxu0 %v412
    %885 = vmatprep.subr.mxu0 0.0
    %886 = vmatpush1.msra.mxu0 %v415
    %887 = vmatprep.subr.mxu0 0.0
    %888 = vmatpush1.msra.mxu0 %v418
    %889 = vmatprep.subr.mxu0 0.0
    %890 = vmatpush1.msra.mxu0 %v421
    %891 = vmatprep.subr.mxu0 0.0
    %892 = vmatpush1.msra.mxu0 %v424
    %893 = vmatprep.subr.mxu0 0.0
    %894 = vmatpush1.msra.mxu0 %v427
    %895 = vmatprep.subr.mxu0 0.0
    %896 = vmatpush1.msra.mxu0 0.0
    %897 = vmatprep.subr.mxu0 0.0
    %898 = vmatpush1.msra.mxu0 0.0
    %899 = vmatprep.subr.mxu0 0.0
    %900 = vmatpush1.msra.mxu0 0.0
    %901 = vmatprep.subr.mxu0 0.0
    %902 = vmatpush1.msra.mxu0 0.0
    %903 = vmatprep.subr.mxu0 0.0
    %904 = vmatpush1.msra.mxu0 0.0
    %905 = vmatprep.subr.mxu0 0.0
    %906 = vmatpush1.msra.mxu0 0.0
    %907 = vmatprep.subr.mxu0 0.0
    %908 = vmatpush1.msra.mxu0 0.0
    %909 = vmatprep.subr.mxu0 0.0
    %910 = vmatpush1.msra.mxu0 0.0
    %911 = vmatprep.subr.mxu0 0.0
    %912 = vmatpush1.msra.mxu0 0.0
    %913 = vmatprep.subr.mxu0 0.0
    %914 = vmatpush1.msra.mxu0 0.0
    %915 = vmatprep.subr.mxu0 0.0
    %916 = vmatpush1.msra.mxu0 0.0
    %917 = vmatprep.subr.mxu0 0.0
    %918 = vmatpush1.msra.mxu0 0.0
    %919 = vmatprep.subr.mxu0 0.0
    %920 = vmatpush1.msra.mxu0 0.0
    %921 = vmatprep.subr.mxu0 0.0
    %922 = vmatpush1.msra.mxu0 0.0
    %923 = vmatprep.subr.mxu0 0.0
    %924 = vmatpush1.msra.mxu0 0.0
    %925 = vmatprep.subr.mxu0 0.0
    %926 = vmatpush1.msra.mxu0 0.0
    %927 = vmatprep.mubr.f32.mxu0 0.0
    %928 = vmatmul.mubr.f32.gmra.mrb[0].mxu0 %v778
    %v929 = vpop.f32.mrb[0].mxu0
    %v930 = vadd.f32 0.0, %v929
    %v931 = vpop.f32.mrb[0].mxu0
    %932 = vdwg.mxu0
    %v933 = vadd.f32 %v789, %v859
    %v934 = vxor.u32 %v933, 2147483648
    %v935 = vmul.f32 %v934, 1.442695
    %v936 = vpow.pop %v935
    %v937 = vadd.f32 %v936, 1.0
    %v938 = vrcp.pop %v937
    %v939 = vmul.f32 1.0, %v938
    %v940 = vadd.f32 %v790, %v861
    %v941 = vxor.u32 %v940, 2147483648
    %v942 = vmul.f32 %v941, 1.442695
    %v943 = vpow.pop %v942
    %v944 = vadd.f32 %v943, 1.0
    %v945 = vrcp.pop %v944
    %v946 = vmul.f32 1.0, %v945
    %v947 = vadd.f32 %v930, %v593
    %v948 = vmul.f32 %v939, %v947
    %v949 = vadd.f32 %v791, %v948
    %v950 = vtanh.pop %v949
    %v951 = vsub.f32 1.0, %v946
    %v952 = vmul.f32 %v951, %v950
    %v953 = vmul.f32 %v946, %v778
    %v954 = vadd.f32 %v952, %v953
    %vm955 = vcmp.eq.s32.totalorder %v378, 3
    %v956 = vsel %vm955, 1, 0
    %957 = vset.pattern.permute.xlu0 0
    %958 = vperm.xlu0 %957, %v956
    %v959 = vpop.permute.xlu0 %958
    %vm960 = vcmp.eq.s32.totalorder %v959, 1
    %v961 = vsel %vm960, %v954, %v785
    %s962 = smul.u32 3, 3
    %s963 = smul.addr %s962, 8
    %s964 = scalar_lea.vmem [#allocation2], %s963
    %v965 = vld [vmem:[%s964] sm:$0xff]
    %v966 = vld [vmem:[%s964 + $0x8] sm:$0xff]
    %v967 = vld [vmem:[%s964 + $0x10] sm:$0xff]
    %968 = vmatprep.subr.mxu0 %v381
    %969 = vmatpush1.msra.mxu0 %v380
    %970 = vmatprep.subr.mxu0 %v384
    %971 = vmatpush1.msra.mxu0 %v383
    %972 = vmatprep.subr.mxu0 %v387
    %973 = vmatpush1.msra.mxu0 %v386
    %974 = vmatprep.subr.mxu0 %v390
    %975 = vmatpush1.msra.mxu0 %v389
    %976 = vmatprep.subr.mxu0 %v393
    %977 = vmatpush1.msra.mxu0 %v392
    %978 = vmatprep.subr.mxu0 %v396
    %979 = vmatpush1.msra.mxu0 %v395
    %980 = vmatprep.subr.mxu0 %v399
    %981 = vmatpush1.msra.mxu0 %v398
    %982 = vmatprep.subr.mxu0 %v402
    %983 = vmatpush1.msra.mxu0 %v401
    %984 = vmatprep.subr.mxu0 %v405
    %985 = vmatpush1.msra.mxu0 %v404
    %986 = vmatprep.subr.mxu0 %v408
    %987 = vmatpush1.msra.mxu0 %v407
    %988 = vmatprep.subr.mxu0 %v411
    %989 = vmatpush1.msra.mxu0 %v410
    %990 = vmatprep.subr.mxu0 %v414
    %991 = vmatpush1.msra.mxu0 %v413
    %992 = vmatprep.subr.mxu0 %v417
    %993 = vmatpush1.msra.mxu0 %v416
    %994 = vmatprep.subr.mxu0 %v420
    %995 = vmatpush1.msra.mxu0 %v419
    %996 = vmatprep.subr.mxu0 %v423
    %997 = vmatpush1.msra.mxu0 %v422
    %998 = vmatprep.subr.mxu0 %v426
    %999 = vmatpush1.msra.mxu0 %v425
    %1000 = vmatprep.subr.mxu0 0.0
    %1001 = vmatpush1.msra.mxu0 0.0
    %1002 = vmatprep.subr.mxu0 0.0
    %1003 = vmatpush1.msra.mxu0 0.0
    %1004 = vmatprep.subr.mxu0 0.0
    %1005 = vmatpush1.msra.mxu0 0.0
    %1006 = vmatprep.subr.mxu0 0.0
    %1007 = vmatpush1.msra.mxu0 0.0
    %1008 = vmatprep.subr.mxu0 0.0
    %1009 = vmatpush1.msra.mxu0 0.0
    %1010 = vmatprep.subr.mxu0 0.0
    %1011 = vmatpush1.msra.mxu0 0.0
    %1012 = vmatprep.subr.mxu0 0.0
    %1013 = vmatpush1.msra.mxu0 0.0
    %1014 = vmatprep.subr.mxu0 0.0
    %1015 = vmatpush1.msra.mxu0 0.0
    %1016 = vmatprep.subr.mxu0 0.0
    %1017 = vmatpush1.msra.mxu0 0.0
    %1018 = vmatprep.subr.mxu0 0.0
    %1019 = vmatpush1.msra.mxu0 0.0
    %1020 = vmatprep.subr.mxu0 0.0
    %1021 = vmatpush1.msra.mxu0 0.0
    %1022 = vmatprep.subr.mxu0 0.0
    %1023 = vmatpush1.msra.mxu0 0.0
    %1024 = vmatprep.subr.mxu0 0.0
    %1025 = vmatpush1.msra.mxu0 0.0
    %1026 = vmatprep.subr.mxu0 0.0
    %1027 = vmatpush1.msra.mxu0 0.0
    %1028 = vmatprep.subr.mxu0 0.0
    %1029 = vmatpush1.msra.mxu0 0.0
    %1030 = vmatprep.subr.mxu0 0.0
    %1031 = vmatpush1.msra.mxu0 0.0
    %1032 = vmatprep.mubr.f32.mxu0 0.0
    %1033 = vmatmul.mubr.f32.gmra.mrb[0].mxu0 %v954
    %v1034 = vpop.f32.mrb[0].mxu0
    %v1035 = vadd.f32 0.0, %v1034
    %v1036 = vpop.f32.mrb[0].mxu0
    %v1037 = vadd.f32 0.0, %v1036
    %1038 = vdwg.mxu0
    %1039 = vmatprep.subr.mxu0 0.0
    %1040 = vmatpush1.msra.mxu0 %v382
    %1041 = vmatprep.subr.mxu0 0.0
    %1042 = vmatpush1.msra.mxu0 %v385
    %1043 = vmatprep.subr.mxu0 0.0
    %1044 = vmatpush1.msra.mxu0 %v388
    %1045 = vmatprep.subr.mxu0 0.0
    %1046 = vmatpush1.msra.mxu0 %v391
    %1047 = vmatprep.subr.mxu0 0.0
    %1048 = vmatpush1.msra.mxu0 %v394
    %1049 = vmatprep.subr.mxu0 0.0
    %1050 = vmatpush1.msra.mxu0 %v397
    %1051 = vmatprep.subr.mxu0 0.0
    %1052 = vmatpush1.msra.mxu0 %v400
    %1053 = vmatprep.subr.mxu0 0.0
    %1054 = vmatpush1.msra.mxu0 %v403
    %1055 = vmatprep.subr.mxu0 0.0
    %1056 = vmatpush1.msra.mxu0 %v406
    %1057 = vmatprep.subr.mxu0 0.0
    %1058 = vmatpush1.msra.mxu0 %v409
    %1059 = vmatprep.subr.mxu0 0.0
    %1060 = vmatpush1.msra.mxu0 %v412
    %1061 = vmatprep.subr.mxu0 0.0
    %1062 = vmatpush1.msra.mxu0 %v415
    %1063 = vmatprep.subr.mxu0 0.0
    %1064 = vmatpush1.msra.mxu0 %v418
    %1065 = vmatprep.subr.mxu0 0.0
    %1066 = vmatpush1.msra.mxu0 %v421
    %1067 = vmatprep.subr.mxu0 0.0
    %1068 = vmatpush1.msra.mxu0 %v424
    %1069 = vmatprep.subr.mxu0 0.0
    %1070 = vmatpush1.msra.mxu0 %v427
    %1071 = vmatprep.subr.mxu0 0.0
    %1072 = vmatpush1.msra.mxu0 0.0
    %1073 = vmatprep.subr.mxu0 0.0
    %1074 = vmatpush1.msra.mxu0 0.0
    %1075 = vmatprep.subr.mxu0 0.0
    %1076 = vmatpush1.msra.mxu0 0.0
    %1077 = vmatprep.subr.mxu0 0.0
    %1078 = vmatpush1.msra.mxu0 0.0
    %1079 = vmatprep.subr.mxu0 0.0
    %1080 = vmatpush1.msra.mxu0 0.0
    %1081 = vmatprep.subr.mxu0 0.0
    %1082 = vmatpush1.msra.mxu0 0.0
    %1083 = vmatprep.subr.mxu0 0.0
    %1084 = vmatpush1.msra.mxu0 0.0
    %1085 = vmatprep.subr.mxu0 0.0
    %1086 = vmatpush1.msra.mxu0 0.0
    %1087 = vmatprep.subr.mxu0 0.0
    %1088 = vmatpush1.msra.mxu0 0.0
    %1089 = vmatprep.subr.mxu0 0.0
    %1090 = vmatpush1.msra.mxu0 0.0
    %1091 = vmatprep.subr.mxu0 0.0
    %1092 = vmatpush1.msra.mxu0 0.0
    %1093 = vmatprep.subr.mxu0 0.0
    %1094 = vmatpush1.msra.mxu0 0.0
    %1095 = vmatprep.subr.mxu0 0.0
    %1096 = vmatpush1.msra.mxu0 0.0
    %1097 = vmatprep.subr.mxu0 0.0
    %1098 = vmatpush1.msra.mxu0 0.0
    %1099 = vmatprep.subr.mxu0 0.0
    %1100 = vmatpush1.msra.mxu0 0.0
    %1101 = vmatprep.subr.mxu0 0.0
    %1102 = vmatpush1.msra.mxu0 0.0
    %1103 = vmatprep.mubr.f32.mxu0 0.0
    %1104 = vmatmul.mubr.f32.gmra.mrb[0].mxu0 %v954
    %v1105 = vpop.f32.mrb[0].mxu0
    %v1106 = vadd.f32 0.0, %v1105
    %v1107 = vpop.f32.mrb[0].mxu0
    %1108 = vdwg.mxu0
    %v1109 = vadd.f32 %v965, %v1035
    %v1110 = vxor.u32 %v1109, 2147483648
    %v1111 = vmul.f32 %v1110, 1.442695
    %v1112 = vpow.pop %v1111
    %v1113 = vadd.f32 %v1112, 1.0
    %v1114 = vrcp.pop %v1113
    %v1115 = vmul.f32 1.0, %v1114
    %v1116 = vadd.f32 %v966, %v1037
    %v1117 = vxor.u32 %v1116, 2147483648
    %v1118 = vmul.f32 %v1117, 1.442695
    %v1119 = vpow.pop %v1118
    %v1120 = vadd.f32 %v1119, 1.0
    %v1121 = vrcp.pop %v1120
    %v1122 = vmul.f32 1.0, %v1121
    %v1123 = vadd.f32 %v1106, %v593
    %v1124 = vmul.f32 %v1115, %v1123
    %v1125 = vadd.f32 %v967, %v1124
    %v1126 = vtanh.pop %v1125
    %v1127 = vsub.f32 1.0, %v1122
    %v1128 = vmul.f32 %v1127, %v1126
    %v1129 = vmul.f32 %v1122, %v954
    %v1130 = vadd.f32 %v1128, %v1129
    %vm1131 = vcmp.eq.s32.totalorder %v378, 4
    %v1132 = vsel %vm1131, 1, 0
    %1133 = vset.pattern.permute.xlu0 0
    %1134 = vperm.xlu0 %1133, %v1132
    %v1135 = vpop.permute.xlu0 %1134
    %vm1136 = vcmp.eq.s32.totalorder %v1135, 1
    %v1137 = vsel %vm1136, %v1130, %v961
    %s1138 = smul.u32 4, 3
    %s1139 = smul.addr %s1138, 8
    %s1140 = scalar_lea.vmem [#allocation2], %s1139
    %v1141 = vld [vmem:[%s1140] sm:$0xff]
    %v1142 = vld [vmem:[%s1140 + $0x8] sm:$0xff]
    %v1143 = vld [vmem:[%s1140 + $0x10] sm:$0xff]
    %1144 = vmatprep.subr.mxu0 %v381
    %1145 = vmatpush1.msra.mxu0 %v380
    %1146 = vmatprep.subr.mxu0 %v384
    %1147 = vmatpush1.msra.mxu0 %v383
    %1148 = vmatprep.subr.mxu0 %v387
    %1149 = vmatpush1.msra.mxu0 %v386
    %1150 = vmatprep.subr.mxu0 %v390
    %1151 = vmatpush1.msra.mxu0 %v389
    %1152 = vmatprep.subr.mxu0 %v393
    %1153 = vmatpush1.msra.mxu0 %v392
    %1154 = vmatprep.subr.mxu0 %v396
    %1155 = vmatpush1.msra.mxu0 %v395
    %1156 = vmatprep.subr.mxu0 %v399
    %1157 = vmatpush1.msra.mxu0 %v398
    %1158 = vmatprep.subr.mxu0 %v402
    %1159 = vmatpush1.msra.mxu0 %v401
    %1160 = vmatprep.subr.mxu0 %v405
    %1161 = vmatpush1.msra.mxu0 %v404
    %1162 = vmatprep.subr.mxu0 %v408
    %1163 = vmatpush1.msra.mxu0 %v407
    %1164 = vmatprep.subr.mxu0 %v411
    %1165 = vmatpush1.msra.mxu0 %v410
    %1166 = vmatprep.subr.mxu0 %v414
    %1167 = vmatpush1.msra.mxu0 %v413
    %1168 = vmatprep.subr.mxu0 %v417
    %1169 = vmatpush1.msra.mxu0 %v416
    %1170 = vmatprep.subr.mxu0 %v420
    %1171 = vmatpush1.msra.mxu0 %v419
    %1172 = vmatprep.subr.mxu0 %v423
    %1173 = vmatpush1.msra.mxu0 %v422
    %1174 = vmatprep.subr.mxu0 %v426
    %1175 = vmatpush1.msra.mxu0 %v425
    %1176 = vmatprep.subr.mxu0 0.0
    %1177 = vmatpush1.msra.mxu0 0.0
    %1178 = vmatprep.subr.mxu0 0.0
    %1179 = vmatpush1.msra.mxu0 0.0
    %1180 = vmatprep.subr.mxu0 0.0
    %1181 = vmatpush1.msra.mxu0 0.0
    %1182 = vmatprep.subr.mxu0 0.0
    %1183 = vmatpush1.msra.mxu0 0.0
    %1184 = vmatprep.subr.mxu0 0.0
    %1185 = vmatpush1.msra.mxu0 0.0
    %1186 = vmatprep.subr.mxu0 0.0
    %1187 = vmatpush1.msra.mxu0 0.0
    %1188 = vmatprep.subr.mxu0 0.0
    %1189 = vmatpush1.msra.mxu0 0.0
    %1190 = vmatprep.subr.mxu0 0.0
    %1191 = vmatpush1.msra.mxu0 0.0
    %1192 = vmatprep.subr.mxu0 0.0
    %1193 = vmatpush1.msra.mxu0 0.0
    %1194 = vmatprep.subr.mxu0 0.0
    %1195 = vmatpush1.msra.mxu0 0.0
    %1196 = vmatprep.subr.mxu0 0.0
    %1197 = vmatpush1.msra.mxu0 0.0
    %1198 = vmatprep.subr.mxu0 0.0
    %1199 = vmatpush1.msra.mxu0 0.0
    %1200 = vmatprep.subr.mxu0 0.0
    %1201 = vmatpush1.msra.mxu0 0.0
    %1202 = vmatprep.subr.mxu0 0.0
    %1203 = vmatpush1.msra.mxu0 0.0
    %1204 = vmatprep.subr.mxu0 0.0
    %1205 = vmatpush1.msra.mxu0 0.0
    %1206 = vmatprep.subr.mxu0 0.0
    %1207 = vmatpush1.msra.mxu0 0.0
    %1208 = vmatprep.mubr.f32.mxu0 0.0
    %1209 = vmatmul.mubr.f32.gmra.mrb[0].mxu0 %v1130
    %v1210 = vpop.f32.mrb[0].mxu0
    %v1211 = vadd.f32 0.0, %v1210
    %v1212 = vpop.f32.mrb[0].mxu0
    %v1213 = vadd.f32 0.0, %v1212
    %1214 = vdwg.mxu0
    %1215 = vmatprep.subr.mxu0 0.0
    %1216 = vmatpush1.msra.mxu0 %v382
    %1217 = vmatprep.subr.mxu0 0.0
    %1218 = vmatpush1.msra.mxu0 %v385
    %1219 = vmatprep.subr.mxu0 0.0
    %1220 = vmatpush1.msra.mxu0 %v388
    %1221 = vmatprep.subr.mxu0 0.0
    %1222 = vmatpush1.msra.mxu0 %v391
    %1223 = vmatprep.subr.mxu0 0.0
    %1224 = vmatpush1.msra.mxu0 %v394
    %1225 = vmatprep.subr.mxu0 0.0
    %1226 = vmatpush1.msra.mxu0 %v397
    %1227 = vmatprep.subr.mxu0 0.0
    %1228 = vmatpush1.msra.mxu0 %v400
    %1229 = vmatprep.subr.mxu0 0.0
    %1230 = vmatpush1.msra.mxu0 %v403
    %1231 = vmatprep.subr.mxu0 0.0
    %1232 = vmatpush1.msra.mxu0 %v406
    %1233 = vmatprep.subr.mxu0 0.0
    %1234 = vmatpush1.msra.mxu0 %v409
    %1235 = vmatprep.subr.mxu0 0.0
    %1236 = vmatpush1.msra.mxu0 %v412
    %1237 = vmatprep.subr.mxu0 0.0
    %1238 = vmatpush1.msra.mxu0 %v415
    %1239 = vmatprep.subr.mxu0 0.0
    %1240 = vmatpush1.msra.mxu0 %v418
    %1241 = vmatprep.subr.mxu0 0.0
    %1242 = vmatpush1.msra.mxu0 %v421
    %1243 = vmatprep.subr.mxu0 0.0
    %1244 = vmatpush1.msra.mxu0 %v424
    %1245 = vmatprep.subr.mxu0 0.0
    %1246 = vmatpush1.msra.mxu0 %v427
    %1247 = vmatprep.subr.mxu0 0.0
    %1248 = vmatpush1.msra.mxu0 0.0
    %1249 = vmatprep.subr.mxu0 0.0
    %1250 = vmatpush1.msra.mxu0 0.0
    %1251 = vmatprep.subr.mxu0 0.0
    %1252 = vmatpush1.msra.mxu0 0.0
    %1253 = vmatprep.subr.mxu0 0.0
    %1254 = vmatpush1.msra.mxu0 0.0
    %1255 = vmatprep.subr.mxu0 0.0
    %1256 = vmatpush1.msra.mxu0 0.0
    %1257 = vmatprep.subr.mxu0 0.0
    %1258 = vmatpush1.msra.mxu0 0.0
    %1259 = vmatprep.subr.mxu0 0.0
    %1260 = vmatpush1.msra.mxu0 0.0
    %1261 = vmatprep.subr.mxu0 0.0
    %1262 = vmatpush1.msra.mxu0 0.0
    %1263 = vmatprep.subr.mxu0 0.0
    %1264 = vmatpush1.msra.mxu0 0.0
    %1265 = vmatprep.subr.mxu0 0.0
    %1266 = vmatpush1.msra.mxu0 0.0
    %1267 = vmatprep.subr.mxu0 0.0
    %1268 = vmatpush1.msra.mxu0 0.0
    %1269 = vmatprep.subr.mxu0 0.0
    %1270 = vmatpush1.msra.mxu0 0.0
    %1271 = vmatprep.subr.mxu0 0.0
    %1272 = vmatpush1.msra.mxu0 0.0
    %1273 = vmatprep.subr.mxu0 0.0
    %1274 = vmatpush1.msra.mxu0 0.0
    %1275 = vmatprep.subr.mxu0 0.0
    %1276 = vmatpush1.msra.mxu0 0.0
    %1277 = vmatprep.subr.mxu0 0.0
    %1278 = vmatpush1.msra.mxu0 0.0
    %1279 = vmatprep.mubr.f32.mxu0 0.0
    %1280 = vmatmul.mubr.f32.gmra.mrb[0].mxu0 %v1130
    %v1281 = vpop.f32.mrb[0].mxu0
    %v1282 = vadd.f32 0.0, %v1281
    %v1283 = vpop.f32.mrb[0].mxu0
    %1284 = vdwg.mxu0
    %v1285 = vadd.f32 %v1141, %v1211
    %v1286 = vxor.u32 %v1285, 2147483648
    %v1287 = vmul.f32 %v1286, 1.442695
    %v1288 = vpow.pop %v1287
    %v1289 = vadd.f32 %v1288, 1.0
    %v1290 = vrcp.pop %v1289
    %v1291 = vmul.f32 1.0, %v1290
    %v1292 = vadd.f32 %v1142, %v1213
    %v1293 = vxor.u32 %v1292, 2147483648
    %v1294 = vmul.f32 %v1293, 1.442695
    %v1295 = vpow.pop %v1294
    %v1296 = vadd.f32 %v1295, 1.0
    %v1297 = vrcp.pop %v1296
    %v1298 = vmul.f32 1.0, %v1297
    %v1299 = vadd.f32 %v1282, %v593
    %v1300 = vmul.f32 %v1291, %v1299
    %v1301 = vadd.f32 %v1143, %v1300
    %v1302 = vtanh.pop %v1301
    %v1303 = vsub.f32 1.0, %v1298
    %v1304 = vmul.f32 %v1303, %v1302
    %v1305 = vmul.f32 %v1298, %v1130
    %v1306 = vadd.f32 %v1304, %v1305
    %vm1307 = vcmp.eq.s32.totalorder %v378, 5
    %v1308 = vsel %vm1307, 1, 0
    %1309 = vset.pattern.permute.xlu0 0
    %1310 = vperm.xlu0 %1309, %v1308
    %v1311 = vpop.permute.xlu0 %1310
    %vm1312 = vcmp.eq.s32.totalorder %v1311, 1
    %v1313 = vsel %vm1312, %v1306, %v1137
    %s1314 = smul.u32 5, 3
    %s1315 = smul.addr %s1314, 8
    %s1316 = scalar_lea.vmem [#allocation2], %s1315
    %v1317 = vld [vmem:[%s1316] sm:$0xff]
    %v1318 = vld [vmem:[%s1316 + $0x8] sm:$0xff]
    %v1319 = vld [vmem:[%s1316 + $0x10] sm:$0xff]
    %1320 = vmatprep.subr.mxu0 %v381
    %1321 = vmatpush1.msra.mxu0 %v380
    %1322 = vmatprep.subr.mxu0 %v384
    %1323 = vmatpush1.msra.mxu0 %v383
    %1324 = vmatprep.subr.mxu0 %v387
    %1325 = vmatpush1.msra.mxu0 %v386
    %1326 = vmatprep.subr.mxu0 %v390
    %1327 = vmatpush1.msra.mxu0 %v389
    %1328 = vmatprep.subr.mxu0 %v393
    %1329 = vmatpush1.msra.mxu0 %v392
    %1330 = vmatprep.subr.mxu0 %v396
    %1331 = vmatpush1.msra.mxu0 %v395
    %1332 = vmatprep.subr.mxu0 %v399
    %1333 = vmatpush1.msra.mxu0 %v398
    %1334 = vmatprep.subr.mxu0 %v402
    %1335 = vmatpush1.msra.mxu0 %v401
    %1336 = vmatprep.subr.mxu0 %v405
    %1337 = vmatpush1.msra.mxu0 %v404
    %1338 = vmatprep.subr.mxu0 %v408
    %1339 = vmatpush1.msra.mxu0 %v407
    %1340 = vmatprep.subr.mxu0 %v411
    %1341 = vmatpush1.msra.mxu0 %v410
    %1342 = vmatprep.subr.mxu0 %v414
    %1343 = vmatpush1.msra.mxu0 %v413
    %1344 = vmatprep.subr.mxu0 %v417
    %1345 = vmatpush1.msra.mxu0 %v416
    %1346 = vmatprep.subr.mxu0 %v420
    %1347 = vmatpush1.msra.mxu0 %v419
    %1348 = vmatprep.subr.mxu0 %v423
    %1349 = vmatpush1.msra.mxu0 %v422
    %1350 = vmatprep.subr.mxu0 %v426
    %1351 = vmatpush1.msra.mxu0 %v425
    %1352 = vmatprep.subr.mxu0 0.0
    %1353 = vmatpush1.msra.mxu0 0.0
    %1354 = vmatprep.subr.mxu0 0.0
    %1355 = vmatpush1.msra.mxu0 0.0
    %1356 = vmatprep.subr.mxu0 0.0
    %1357 = vmatpush1.msra.mxu0 0.0
    %1358 = vmatprep.subr.mxu0 0.0
    %1359 = vmatpush1.msra.mxu0 0.0
    %1360 = vmatprep.subr.mxu0 0.0
    %1361 = vmatpush1.msra.mxu0 0.0
    %1362 = vmatprep.subr.mxu0 0.0
    %1363 = vmatpush1.msra.mxu0 0.0
    %1364 = vmatprep.subr.mxu0 0.0
    %1365 = vmatpush1.msra.mxu0 0.0
    %1366 = vmatprep.subr.mxu0 0.0
    %1367 = vmatpush1.msra.mxu0 0.0
    %1368 = vmatprep.subr.mxu0 0.0
    %1369 = vmatpush1.msra.mxu0 0.0
    %1370 = vmatprep.subr.mxu0 0.0
    %1371 = vmatpush1.msra.mxu0 0.0
    %1372 = vmatprep.subr.mxu0 0.0
    %1373 = vmatpush1.msra.mxu0 0.0
    %1374 = vmatprep.subr.mxu0 0.0
    %1375 = vmatpush1.msra.mxu0 0.0
    %1376 = vmatprep.subr.mxu0 0.0
    %1377 = vmatpush1.msra.mxu0 0.0
    %1378 = vmatprep.subr.mxu0 0.0
    %1379 = vmatpush1.msra.mxu0 0.0
    %1380 = vmatprep.subr.mxu0 0.0
    %1381 = vmatpush1.msra.mxu0 0.0
    %1382 = vmatprep.subr.mxu0 0.0
    %1383 = vmatpush1.msra.mxu0 0.0
    %1384 = vmatprep.mubr.f32.mxu0 0.0
    %1385 = vmatmul.mubr.f32.gmra.mrb[0].mxu0 %v1306
    %v1386 = vpop.f32.mrb[0].mxu0
    %v1387 = vadd.f32 0.0, %v1386
    %v1388 = vpop.f32.mrb[0].mxu0
    %v1389 = vadd.f32 0.0, %v1388
    %1390 = vdwg.mxu0
    %1391 = vmatprep.subr.mxu0 0.0
    %1392 = vmatpush1.msra.mxu0 %v382
    %1393 = vmatprep.subr.mxu0 0.0
    %1394 = vmatpush1.msra.mxu0 %v385
    %1395 = vmatprep.subr.mxu0 0.0
    %1396 = vmatpush1.msra.mxu0 %v388
    %1397 = vmatprep.subr.mxu0 0.0
    %1398 = vmatpush1.msra.mxu0 %v391
    %1399 = vmatprep.subr.mxu0 0.0
    %1400 = vmatpush1.msra.mxu0 %v394
    %1401 = vmatprep.subr.mxu0 0.0
    %1402 = vmatpush1.msra.mxu0 %v397
    %1403 = vmatprep.subr.mxu0 0.0
    %1404 = vmatpush1.msra.mxu0 %v400
    %1405 = vmatprep.subr.mxu0 0.0
    %1406 = vmatpush1.msra.mxu0 %v403
    %1407 = vmatprep.subr.mxu0 0.0
    %1408 = vmatpush1.msra.mxu0 %v406
    %1409 = vmatprep.subr.mxu0 0.0
    %1410 = vmatpush1.msra.mxu0 %v409
    %1411 = vmatprep.subr.mxu0 0.0
    %1412 = vmatpush1.msra.mxu0 %v412
    %1413 = vmatprep.subr.mxu0 0.0
    %1414 = vmatpush1.msra.mxu0 %v415
    %1415 = vmatprep.subr.mxu0 0.0
    %1416 = vmatpush1.msra.mxu0 %v418
    %1417 = vmatprep.subr.mxu0 0.0
    %1418 = vmatpush1.msra.mxu0 %v421
    %1419 = vmatprep.subr.mxu0 0.0
    %1420 = vmatpush1.msra.mxu0 %v424
    %1421 = vmatprep.subr.mxu0 0.0
    %1422 = vmatpush1.msra.mxu0 %v427
    %1423 = vmatprep.subr.mxu0 0.0
    %1424 = vmatpush1.msra.mxu0 0.0
    %1425 = vmatprep.subr.mxu0 0.0
    %1426 = vmatpush1.msra.mxu0 0.0
    %1427 = vmatprep.subr.mxu0 0.0
    %1428 = vmatpush1.msra.mxu0 0.0
    %1429 = vmatprep.subr.mxu0 0.0
    %1430 = vmatpush1.msra.mxu0 0.0
    %1431 = vmatprep.subr.mxu0 0.0
    %1432 = vmatpush1.msra.mxu0 0.0
    %1433 = vmatprep.subr.mxu0 0.0
    %1434 = vmatpush1.msra.mxu0 0.0
    %1435 = vmatprep.subr.mxu0 0.0
    %1436 = vmatpush1.msra.mxu0 0.0
    %1437 = vmatprep.subr.mxu0 0.0
    %1438 = vmatpush1.msra.mxu0 0.0
    %1439 = vmatprep.subr.mxu0 0.0
    %1440 = vmatpush1.msra.mxu0 0.0
    %1441 = vmatprep.subr.mxu0 0.0
    %1442 = vmatpush1.msra.mxu0 0.0
    %1443 = vmatprep.subr.mxu0 0.0
    %1444 = vmatpush1.msra.mxu0 0.0
    %1445 = vmatprep.subr.mxu0 0.0
    %1446 = vmatpush1.msra.mxu0 0.0
    %1447 = vmatprep.subr.mxu0 0.0
    %1448 = vmatpush1.msra.mxu0 0.0
    %1449 = vmatprep.subr.mxu0 0.0
    %1450 = vmatpush1.msra.mxu0 0.0
    %1451 = vmatprep.subr.mxu0 0.0
    %1452 = vmatpush1.msra.mxu0 0.0
    %1453 = vmatprep.subr.mxu0 0.0
    %1454 = vmatpush1.msra.mxu0 0.0
    %1455 = vmatprep.mubr.f32.mxu0 0.0
    %1456 = vmatmul.mubr.f32.gmra.mrb[0].mxu0 %v1306
    %v1457 = vpop.f32.mrb[0].mxu0
    %v1458 = vadd.f32 0.0, %v1457
    %v1459 = vpop.f32.mrb[0].mxu0
    %1460 = vdwg.mxu0
    %v1461 = vadd.f32 %v1317, %v1387
    %v1462 = vxor.u32 %v1461, 2147483648
    %v1463 = vmul.f32 %v1462, 1.442695
    %v1464 = vpow.pop %v1463
    %v1465 = vadd.f32 %v1464, 1.0
    %v1466 = vrcp.pop %v1465
    %v1467 = vmul.f32 1.0, %v1466
    %v1468 = vadd.f32 %v1318, %v1389
    %v1469 = vxor.u32 %v1468, 2147483648
    %v1470 = vmul.f32 %v1469, 1.442695
    %v1471 = vpow.pop %v1470
    %v1472 = vadd.f32 %v1471, 1.0
    %v1473 = vrcp.pop %v1472
    %v1474 = vmul.f32 1.0, %v1473
    %v1475 = vadd.f32 %v1458, %v593
    %v1476 = vmul.f32 %v1467, %v1475
    %v1477 = vadd.f32 %v1319, %v1476
    %v1478 = vtanh.pop %v1477
    %v1479 = vsub.f32 1.0, %v1474
    %v1480 = vmul.f32 %v1479, %v1478
    %v1481 = vmul.f32 %v1474, %v1306
    %v1482 = vadd.f32 %v1480, %v1481
    %vm1483 = vcmp.eq.s32.totalorder %v378, 6
    %v1484 = vsel %vm1483, 1, 0
    %1485 = vset.pattern.permute.xlu0 0
    %1486 = vperm.xlu0 %1485, %v1484
    %v1487 = vpop.permute.xlu0 %1486
    %vm1488 = vcmp.eq.s32.totalorder %v1487, 1
    %v1489 = vsel %vm1488, %v1482, %v1313
    %s1490 = smul.u32 6, 3
    %s1491 = smul.addr %s1490, 8
    %s1492 = scalar_lea.vmem [#allocation2], %s1491
    %v1493 = vld [vmem:[%s1492] sm:$0xff]
    %v1494 = vld [vmem:[%s1492 + $0x8] sm:$0xff]
    %v1495 = vld [vmem:[%s1492 + $0x10] sm:$0xff]
    %1496 = vmatprep.subr.mxu0 %v381
    %1497 = vmatpush1.msra.mxu0 %v380
    %1498 = vmatprep.subr.mxu0 %v384
    %1499 = vmatpush1.msra.mxu0 %v383
    %1500 = vmatprep.subr.mxu0 %v387
    %1501 = vmatpush1.msra.mxu0 %v386
    %1502 = vmatprep.subr.mxu0 %v390
    %1503 = vmatpush1.msra.mxu0 %v389
    %1504 = vmatprep.subr.mxu0 %v393
    %1505 = vmatpush1.msra.mxu0 %v392
    %1506 = vmatprep.subr.mxu0 %v396
    %1507 = vmatpush1.msra.mxu0 %v395
    %1508 = vmatprep.subr.mxu0 %v399
    %1509 = vmatpush1.msra.mxu0 %v398
    %1510 = vmatprep.subr.mxu0 %v402
    %1511 = vmatpush1.msra.mxu0 %v401
    %1512 = vmatprep.subr.mxu0 %v405
    %1513 = vmatpush1.msra.mxu0 %v404
    %1514 = vmatprep.subr.mxu0 %v408
    %1515 = vmatpush1.msra.mxu0 %v407
    %1516 = vmatprep.subr.mxu0 %v411
    %1517 = vmatpush1.msra.mxu0 %v410
    %1518 = vmatprep.subr.mxu0 %v414
    %1519 = vmatpush1.msra.mxu0 %v413
    %1520 = vmatprep.subr.mxu0 %v417
    %1521 = vmatpush1.msra.mxu0 %v416
    %1522 = vmatprep.subr.mxu0 %v420
    %1523 = vmatpush1.msra.mxu0 %v419
    %1524 = vmatprep.subr.mxu0 %v423
    %1525 = vmatpush1.msra.mxu0 %v422
    %1526 = vmatprep.subr.mxu0 %v426
    %1527 = vmatpush1.msra.mxu0 %v425
    %1528 = vmatprep.subr.mxu0 0.0
    %1529 = vmatpush1.msra.mxu0 0.0
    %1530 = vmatprep.subr.mxu0 0.0
    %1531 = vmatpush1.msra.mxu0 0.0
    %1532 = vmatprep.subr.mxu0 0.0
    %1533 = vmatpush1.msra.mxu0 0.0
    %1534 = vmatprep.subr.mxu0 0.0
    %1535 = vmatpush1.msra.mxu0 0.0
    %1536 = vmatprep.subr.mxu0 0.0
    %1537 = vmatpush1.msra.mxu0 0.0
    %1538 = vmatprep.subr.mxu0 0.0
    %1539 = vmatpush1.msra.mxu0 0.0
    %1540 = vmatprep.subr.mxu0 0.0
    %1541 = vmatpush1.msra.mxu0 0.0
    %1542 = vmatprep.subr.mxu0 0.0
    %1543 = vmatpush1.msra.mxu0 0.0
    %1544 = vmatprep.subr.mxu0 0.0
    %1545 = vmatpush1.msra.mxu0 0.0
    %1546 = vmatprep.subr.mxu0 0.0
    %1547 = vmatpush1.msra.mxu0 0.0
    %1548 = vmatprep.subr.mxu0 0.0
    %1549 = vmatpush1.msra.mxu0 0.0
    %1550 = vmatprep.subr.mxu0 0.0
    %1551 = vmatpush1.msra.mxu0 0.0
    %1552 = vmatprep.subr.mxu0 0.0
    %1553 = vmatpush1.msra.mxu0 0.0
    %1554 = vmatprep.subr.mxu0 0.0
    %1555 = vmatpush1.msra.mxu0 0.0
    %1556 = vmatprep.subr.mxu0 0.0
    %1557 = vmatpush1.msra.mxu0 0.0
    %1558 = vmatprep.subr.mxu0 0.0
    %1559 = vmatpush1.msra.mxu0 0.0
    %1560 = vmatprep.mubr.f32.mxu0 0.0
    %1561 = vmatmul.mubr.f32.gmra.mrb[0].mxu0 %v1482
    %v1562 = vpop.f32.mrb[0].mxu0
    %v1563 = vadd.f32 0.0, %v1562
    %v1564 = vpop.f32.mrb[0].mxu0
    %v1565 = vadd.f32 0.0, %v1564
    %1566 = vdwg.mxu0
    %1567 = vmatprep.subr.mxu0 0.0
    %1568 = vmatpush1.msra.mxu0 %v382
    %1569 = vmatprep.subr.mxu0 0.0
    %1570 = vmatpush1.msra.mxu0 %v385
    %1571 = vmatprep.subr.mxu0 0.0
    %1572 = vmatpush1.msra.mxu0 %v388
    %1573 = vmatprep.subr.mxu0 0.0
    %1574 = vmatpush1.msra.mxu0 %v391
    %1575 = vmatprep.subr.mxu0 0.0
    %1576 = vmatpush1.msra.mxu0 %v394
    %1577 = vmatprep.subr.mxu0 0.0
    %1578 = vmatpush1.msra.mxu0 %v397
    %1579 = vmatprep.subr.mxu0 0.0
    %1580 = vmatpush1.msra.mxu0 %v400
    %1581 = vmatprep.subr.mxu0 0.0
    %1582 = vmatpush1.msra.mxu0 %v403
    %1583 = vmatprep.subr.mxu0 0.0
    %1584 = vmatpush1.msra.mxu0 %v406
    %1585 = vmatprep.subr.mxu0 0.0
    %1586 = vmatpush1.msra.mxu0 %v409
    %1587 = vmatprep.subr.mxu0 0.0
    %1588 = vmatpush1.msra.mxu0 %v412
    %1589 = vmatprep.subr.mxu0 0.0
    %1590 = vmatpush1.msra.mxu0 %v415
    %1591 = vmatprep.subr.mxu0 0.0
    %1592 = vmatpush1.msra.mxu0 %v418
    %1593 = vmatprep.subr.mxu0 0.0
    %1594 = vmatpush1.msra.mxu0 %v421
    %1595 = vmatprep.subr.mxu0 0.0
    %1596 = vmatpush1.msra.mxu0 %v424
    %1597 = vmatprep.subr.mxu0 0.0
    %1598 = vmatpush1.msra.mxu0 %v427
    %1599 = vmatprep.subr.mxu0 0.0
    %1600 = vmatpush1.msra.mxu0 0.0
    %1601 = vmatprep.subr.mxu0 0.0
    %1602 = vmatpush1.msra.mxu0 0.0
    %1603 = vmatprep.subr.mxu0 0.0
    %1604 = vmatpush1.msra.mxu0 0.0
    %1605 = vmatprep.subr.mxu0 0.0
    %1606 = vmatpush1.msra.mxu0 0.0
    %1607 = vmatprep.subr.mxu0 0.0
    %1608 = vmatpush1.msra.mxu0 0.0
    %1609 = vmatprep.subr.mxu0 0.0
    %1610 = vmatpush1.msra.mxu0 0.0
    %1611 = vmatprep.subr.mxu0 0.0
    %1612 = vmatpush1.msra.mxu0 0.0
    %1613 = vmatprep.subr.mxu0 0.0
    %1614 = vmatpush1.msra.mxu0 0.0
    %1615 = vmatprep.subr.mxu0 0.0
    %1616 = vmatpush1.msra.mxu0 0.0
    %1617 = vmatprep.subr.mxu0 0.0
    %1618 = vmatpush1.msra.mxu0 0.0
    %1619 = vmatprep.subr.mxu0 0.0
    %1620 = vmatpush1.msra.mxu0 0.0
    %1621 = vmatprep.subr.mxu0 0.0
    %1622 = vmatpush1.msra.mxu0 0.0
    %1623 = vmatprep.subr.mxu0 0.0
    %1624 = vmatpush1.msra.mxu0 0.0
    %1625 = vmatprep.subr.mxu0 0.0
    %1626 = vmatpush1.msra.mxu0 0.0
    %1627 = vmatprep.subr.mxu0 0.0
    %1628 = vmatpush1.msra.mxu0 0.0
    %1629 = vmatprep.subr.mxu0 0.0
    %1630 = vmatpush1.msra.mxu0 0.0
    %1631 = vmatprep.mubr.f32.mxu0 0.0
    %1632 = vmatmul.mubr.f32.gmra.mrb[0].mxu0 %v1482
    %v1633 = vpop.f32.mrb[0].mxu0
    %v1634 = vadd.f32 0.0, %v1633
    %v1635 = vpop.f32.mrb[0].mxu0
    %1636 = vdwg.mxu0
    %v1637 = vadd.f32 %v1493, %v1563
    %v1638 = vxor.u32 %v1637, 2147483648
    %v1639 = vmul.f32 %v1638, 1.442695
    %v1640 = vpow.pop %v1639
    %v1641 = vadd.f32 %v1640, 1.0
    %v1642 = vrcp.pop %v1641
    %v1643 = vmul.f32 1.0, %v1642
    %v1644 = vadd.f32 %v1494, %v1565
    %v1645 = vxor.u32 %v1644, 2147483648
    %v1646 = vmul.f32 %v1645, 1.442695
    %v1647 = vpow.pop %v1646
    %v1648 = vadd.f32 %v1647, 1.0
    %v1649 = vrcp.pop %v1648
    %v1650 = vmul.f32 1.0, %v1649
    %v1651 = vadd.f32 %v1634, %v593
    %v1652 = vmul.f32 %v1643, %v1651
    %v1653 = vadd.f32 %v1495, %v1652
    %v1654 = vtanh.pop %v1653
    %v1655 = vsub.f32 1.0, %v1650
    %v1656 = vmul.f32 %v1655, %v1654
    %v1657 = vmul.f32 %v1650, %v1482
    %v1658 = vadd.f32 %v1656, %v1657
    %vm1659 = vcmp.eq.s32.totalorder %v378, 7
    %v1660 = vsel %vm1659, 1, 0
    %1661 = vset.pattern.permute.xlu0 0
    %1662 = vperm.xlu0 %1661, %v1660
    %v1663 = vpop.permute.xlu0 %1662
    %vm1664 = vcmp.eq.s32.totalorder %v1663, 1
    %v1665 = vsel %vm1664, %v1658, %v1489
    %s1666 = smul.u32 7, 3
    %s1667 = smul.addr %s1666, 8
    %s1668 = scalar_lea.vmem [#allocation2], %s1667
    %v1669 = vld [vmem:[%s1668] sm:$0xff]
    %v1670 = vld [vmem:[%s1668 + $0x8] sm:$0xff]
    %v1671 = vld [vmem:[%s1668 + $0x10] sm:$0xff]
    %1672 = vmatprep.subr.mxu0 %v381
    %1673 = vmatpush1.msra.mxu0 %v380
    %1674 = vmatprep.subr.mxu0 %v384
    %1675 = vmatpush1.msra.mxu0 %v383
    %1676 = vmatprep.subr.mxu0 %v387
    %1677 = vmatpush1.msra.mxu0 %v386
    %1678 = vmatprep.subr.mxu0 %v390
    %1679 = vmatpush1.msra.mxu0 %v389
    %1680 = vmatprep.subr.mxu0 %v393
    %1681 = vmatpush1.msra.mxu0 %v392
    %1682 = vmatprep.subr.mxu0 %v396
    %1683 = vmatpush1.msra.mxu0 %v395
    %1684 = vmatprep.subr.mxu0 %v399
    %1685 = vmatpush1.msra.mxu0 %v398
    %1686 = vmatprep.subr.mxu0 %v402
    %1687 = vmatpush1.msra.mxu0 %v401
    %1688 = vmatprep.subr.mxu0 %v405
    %1689 = vmatpush1.msra.mxu0 %v404
    %1690 = vmatprep.subr.mxu0 %v408
    %1691 = vmatpush1.msra.mxu0 %v407
    %1692 = vmatprep.subr.mxu0 %v411
    %1693 = vmatpush1.msra.mxu0 %v410
    %1694 = vmatprep.subr.mxu0 %v414
    %1695 = vmatpush1.msra.mxu0 %v413
    %1696 = vmatprep.subr.mxu0 %v417
    %1697 = vmatpush1.msra.mxu0 %v416
    %1698 = vmatprep.subr.mxu0 %v420
    %1699 = vmatpush1.msra.mxu0 %v419
    %1700 = vmatprep.subr.mxu0 %v423
    %1701 = vmatpush1.msra.mxu0 %v422
    %1702 = vmatprep.subr.mxu0 %v426
    %1703 = vmatpush1.msra.mxu0 %v425
    %1704 = vmatprep.subr.mxu0 0.0
    %1705 = vmatpush1.msra.mxu0 0.0
    %1706 = vmatprep.subr.mxu0 0.0
    %1707 = vmatpush1.msra.mxu0 0.0
    %1708 = vmatprep.subr.mxu0 0.0
    %1709 = vmatpush1.msra.mxu0 0.0
    %1710 = vmatprep.subr.mxu0 0.0
    %1711 = vmatpush1.msra.mxu0 0.0
    %1712 = vmatprep.subr.mxu0 0.0
    %1713 = vmatpush1.msra.mxu0 0.0
    %1714 = vmatprep.subr.mxu0 0.0
    %1715 = vmatpush1.msra.mxu0 0.0
    %1716 = vmatprep.subr.mxu0 0.0
    %1717 = vmatpush1.msra.mxu0 0.0
    %1718 = vmatprep.subr.mxu0 0.0
    %1719 = vmatpush1.msra.mxu0 0.0
    %1720 = vmatprep.subr.mxu0 0.0
    %1721 = vmatpush1.msra.mxu0 0.0
    %1722 = vmatprep.subr.mxu0 0.0
    %1723 = vmatpush1.msra.mxu0 0.0
    %1724 = vmatprep.subr.mxu0 0.0
    %1725 = vmatpush1.msra.mxu0 0.0
    %1726 = vmatprep.subr.mxu0 0.0
    %1727 = vmatpush1.msra.mxu0 0.0
    %1728 = vmatprep.subr.mxu0 0.0
    %1729 = vmatpush1.msra.mxu0 0.0
    %1730 = vmatprep.subr.mxu0 0.0
    %1731 = vmatpush1.msra.mxu0 0.0
    %1732 = vmatprep.subr.mxu0 0.0
    %1733 = vmatpush1.msra.mxu0 0.0
    %1734 = vmatprep.subr.mxu0 0.0
    %1735 = vmatpush1.msra.mxu0 0.0
    %1736 = vmatprep.mubr.f32.mxu0 0.0
    %1737 = vmatmul.mubr.f32.gmra.mrb[0].mxu0 %v1658
    %v1738 = vpop.f32.mrb[0].mxu0
    %v1739 = vadd.f32 0.0, %v1738
    %v1740 = vpop.f32.mrb[0].mxu0
    %v1741 = vadd.f32 0.0, %v1740
    %1742 = vdwg.mxu0
    %1743 = vmatprep.subr.mxu0 0.0
    %1744 = vmatpush1.msra.mxu0 %v382
    %1745 = vmatprep.subr.mxu0 0.0
    %1746 = vmatpush1.msra.mxu0 %v385
    %1747 = vmatprep.subr.mxu0 0.0
    %1748 = vmatpush1.msra.mxu0 %v388
    %1749 = vmatprep.subr.mxu0 0.0
    %1750 = vmatpush1.msra.mxu0 %v391
    %1751 = vmatprep.subr.mxu0 0.0
    %1752 = vmatpush1.msra.mxu0 %v394
    %1753 = vmatprep.subr.mxu0 0.0
    %1754 = vmatpush1.msra.mxu0 %v397
    %1755 = vmatprep.subr.mxu0 0.0
    %1756 = vmatpush1.msra.mxu0 %v400
    %1757 = vmatprep.subr.mxu0 0.0
    %1758 = vmatpush1.msra.mxu0 %v403
    %1759 = vmatprep.subr.mxu0 0.0
    %1760 = vmatpush1.msra.mxu0 %v406
    %1761 = vmatprep.subr.mxu0 0.0
    %1762 = vmatpush1.msra.mxu0 %v409
    %1763 = vmatprep.subr.mxu0 0.0
    %1764 = vmatpush1.msra.mxu0 %v412
    %1765 = vmatprep.subr.mxu0 0.0
    %1766 = vmatpush1.msra.mxu0 %v415
    %1767 = vmatprep.subr.mxu0 0.0
    %1768 = vmatpush1.msra.mxu0 %v418
    %1769 = vmatprep.subr.mxu0 0.0
    %1770 = vmatpush1.msra.mxu0 %v421
    %1771 = vmatprep.subr.mxu0 0.0
    %1772 = vmatpush1.msra.mxu0 %v424
    %1773 = vmatprep.subr.mxu0 0.0
    %1774 = vmatpush1.msra.mxu0 %v427
    %1775 = vmatprep.subr.mxu0 0.0
    %1776 = vmatpush1.msra.mxu0 0.0
    %1777 = vmatprep.subr.mxu0 0.0
    %1778 = vmatpush1.msra.mxu0 0.0
    %1779 = vmatprep.subr.mxu0 0.0
    %1780 = vmatpush1.msra.mxu0 0.0
    %1781 = vmatprep.subr.mxu0 0.0
    %1782 = vmatpush1.msra.mxu0 0.0
    %1783 = vmatprep.subr.mxu0 0.0
    %1784 = vmatpush1.msra.mxu0 0.0
    %1785 = vmatprep.subr.mxu0 0.0
    %1786 = vmatpush1.msra.mxu0 0.0
    %1787 = vmatprep.subr.mxu0 0.0
    %1788 = vmatpush1.msra.mxu0 0.0
    %1789 = vmatprep.subr.mxu0 0.0
    %1790 = vmatpush1.msra.mxu0 0.0
    %1791 = vmatprep.subr.mxu0 0.0
    %1792 = vmatpush1.msra.mxu0 0.0
    %1793 = vmatprep.subr.mxu0 0.0
    %1794 = vmatpush1.msra.mxu0 0.0
    %1795 = vmatprep.subr.mxu0 0.0
    %1796 = vmatpush1.msra.mxu0 0.0
    %1797 = vmatprep.subr.mxu0 0.0
    %1798 = vmatpush1.msra.mxu0 0.0
    %1799 = vmatprep.subr.mxu0 0.0
    %1800 = vmatpush1.msra.mxu0 0.0
    %1801 = vmatprep.subr.mxu0 0.0
    %1802 = vmatpush1.msra.mxu0 0.0
    %1803 = vmatprep.subr.mxu0 0.0
    %1804 = vmatpush1.msra.mxu0 0.0
    %1805 = vmatprep.subr.mxu0 0.0
    %1806 = vmatpush1.msra.mxu0 0.0
    %1807 = vmatprep.mubr.f32.mxu0 0.0
    %1808 = vmatmul.mubr.f32.gmra.mrb[0].mxu0 %v1658
    %v1809 = vpop.f32.mrb[0].mxu0
    %v1810 = vadd.f32 0.0, %v1809
    %v1811 = vpop.f32.mrb[0].mxu0
    %1812 = vdwg.mxu0
    %v1813 = vadd.f32 %v1669, %v1739
    %v1814 = vxor.u32 %v1813, 2147483648
    %v1815 = vmul.f32 %v1814, 1.442695
    %v1816 = vpow.pop %v1815
    %v1817 = vadd.f32 %v1816, 1.0
    %v1818 = vrcp.pop %v1817
    %v1819 = vmul.f32 1.0, %v1818
    %v1820 = vadd.f32 %v1670, %v1741
    %v1821 = vxor.u32 %v1820, 2147483648
    %v1822 = vmul.f32 %v1821, 1.442695
    %v1823 = vpow.pop %v1822
    %v1824 = vadd.f32 %v1823, 1.0
    %v1825 = vrcp.pop %v1824
    %v1826 = vmul.f32 1.0, %v1825
    %v1827 = vadd.f32 %v1810, %v593
    %v1828 = vmul.f32 %v1819, %v1827
    %v1829 = vadd.f32 %v1671, %v1828
    %v1830 = vtanh.pop %v1829
    %v1831 = vsub.f32 1.0, %v1826
    %v1832 = vmul.f32 %v1831, %v1830
    %v1833 = vmul.f32 %v1826, %v1658
    %v1834 = vadd.f32 %v1832, %v1833
    %vm1835 = vcmp.eq.s32.totalorder %v378, 8
    %v1836 = vsel %vm1835, 1, 0
    %1837 = vset.pattern.permute.xlu0 0
    %1838 = vperm.xlu0 %1837, %v1836
    %v1839 = vpop.permute.xlu0 %1838
    %vm1840 = vcmp.eq.s32.totalorder %v1839, 1
    %v1841 = vsel %vm1840, %v1834, %v1665
    %v1842 = vld [vmem:[%s6] sm:$0xff]
    %v1843 = vld [vmem:[%s6 + $0x8] sm:$0xff]
    %v1844 = vld [vmem:[%s6 + $0x10] sm:$0xff]
    %v1845 = vld [vmem:[%s6 + $0x18] sm:$0xff]
    %v1846 = vld [vmem:[%s6 + $0x20] sm:$0xff]
    %v1847 = vld [vmem:[%s6 + $0x28] sm:$0xff]
    %v1848 = vld [vmem:[%s6 + $0x30] sm:$0xff]
    %v1849 = vld [vmem:[%s6 + $0x38] sm:$0xff]
    %v1850 = vld [vmem:[%s6 + $0x40] sm:$0xff]
    %v1851 = vld [vmem:[%s6 + $0x48] sm:$0xff]
    %v1852 = vld [vmem:[%s6 + $0x50] sm:$0xff]
    %v1853 = vld [vmem:[%s6 + $0x58] sm:$0xff]
    %v1854 = vld [vmem:[%s6 + $0x60] sm:$0xff]
    %v1855 = vld [vmem:[%s6 + $0x68] sm:$0xff]
    %v1856 = vld [vmem:[%s6 + $0x70] sm:$0xff]
    %v1857 = vld [vmem:[%s6 + $0x78] sm:$0xff]
    %v1858 = vld [vmem:[%s7] sm:$0x1]
    %v1860 = vlaneseq
    %v1861 = vshrl.u32 %v1860, 7
    %v1862 = vsub.s32 0, %v1861
    %v1863 = vrot.slane %v1858, %v1862
    %1865 = vmatprep.subr.mxu0 0.0
    %1866 = vmatpush1.msra.mxu0 %v1842
    %1867 = vmatprep.subr.mxu0 0.0
    %1868 = vmatpush1.msra.mxu0 %v1843
    %1869 = vmatprep.subr.mxu0 0.0
    %1870 = vmatpush1.msra.mxu0 %v1844
    %1871 = vmatprep.subr.mxu0 0.0
    %1872 = vmatpush1.msra.mxu0 %v1845
    %1873 = vmatprep.subr.mxu0 0.0
    %1874 = vmatpush1.msra.mxu0 %v1846
    %1875 = vmatprep.subr.mxu0 0.0
    %1876 = vmatpush1.msra.mxu0 %v1847
    %1877 = vmatprep.subr.mxu0 0.0
    %1878 = vmatpush1.msra.mxu0 %v1848
    %1879 = vmatprep.subr.mxu0 0.0
    %1880 = vmatpush1.msra.mxu0 %v1849
    %1881 = vmatprep.subr.mxu0 0.0
    %1882 = vmatpush1.msra.mxu0 %v1850
    %1883 = vmatprep.subr.mxu0 0.0
    %1884 = vmatpush1.msra.mxu0 %v1851
    %1885 = vmatprep.subr.mxu0 0.0
    %1886 = vmatpush1.msra.mxu0 %v1852
    %1887 = vmatprep.subr.mxu0 0.0
    %1888 = vmatpush1.msra.mxu0 %v1853
    %1889 = vmatprep.subr.mxu0 0.0
    %1890 = vmatpush1.msra.mxu0 %v1854
    %1891 = vmatprep.subr.mxu0 0.0
    %1892 = vmatpush1.msra.mxu0 %v1855
    %1893 = vmatprep.subr.mxu0 0.0
    %1894 = vmatpush1.msra.mxu0 %v1856
    %1895 = vmatprep.subr.mxu0 0.0
    %1896 = vmatpush1.msra.mxu0 %v1857
    %1897 = vmatprep.subr.mxu0 0.0
    %1898 = vmatpush1.msra.mxu0 0.0
    %1899 = vmatprep.subr.mxu0 0.0
    %1900 = vmatpush1.msra.mxu0 0.0
    %1901 = vmatprep.subr.mxu0 0.0
    %1902 = vmatpush1.msra.mxu0 0.0
    %1903 = vmatprep.subr.mxu0 0.0
    %1904 = vmatpush1.msra.mxu0 0.0
    %1905 = vmatprep.subr.mxu0 0.0
    %1906 = vmatpush1.msra.mxu0 0.0
    %1907 = vmatprep.subr.mxu0 0.0
    %1908 = vmatpush1.msra.mxu0 0.0
    %1909 = vmatprep.subr.mxu0 0.0
    %1910 = vmatpush1.msra.mxu0 0.0
    %1911 = vmatprep.subr.mxu0 0.0
    %1912 = vmatpush1.msra.mxu0 0.0
    %1913 = vmatprep.subr.mxu0 0.0
    %1914 = vmatpush1.msra.mxu0 0.0
    %1915 = vmatprep.subr.mxu0 0.0
    %1916 = vmatpush1.msra.mxu0 0.0
    %1917 = vmatprep.subr.mxu0 0.0
    %1918 = vmatpush1.msra.mxu0 0.0
    %1919 = vmatprep.subr.mxu0 0.0
    %1920 = vmatpush1.msra.mxu0 0.0
    %1921 = vmatprep.subr.mxu0 0.0
    %1922 = vmatpush1.msra.mxu0 0.0
    %1923 = vmatprep.subr.mxu0 0.0
    %1924 = vmatpush1.msra.mxu0 0.0
    %1925 = vmatprep.subr.mxu0 0.0
    %1926 = vmatpush1.msra.mxu0 0.0
    %1927 = vmatprep.subr.mxu0 0.0
    %1928 = vmatpush1.msra.mxu0 0.0
    %1929 = vmatprep.mubr.f32.mxu0 0.0
    %1930 = vmatmul.mubr.f32.gmra.mrb[0].mxu0 %v1841
    %v1931 = vpop.f32.mrb[0].mxu0
    %v1932 = vadd.f32 %v1863, %v1931
    %v1933 = vpop.f32.mrb[0].mxu0
    %1934 = vdwg.mxu0
    %v1935 = vmax.f32 %v1932, 0.0
    %v1936 = vld [vmem:[%s8] sm:$0xff]
    %v1937 = vld [vmem:[%s8 + $0x8] sm:$0xff]
    %v1938 = vld [vmem:[%s8 + $0x10] sm:$0xff]
    %v1939 = vld [vmem:[%s8 + $0x18] sm:$0xff]
    %v1940 = vld [vmem:[%s8 + $0x20] sm:$0xff]
    %v1941 = vld [vmem:[%s8 + $0x28] sm:$0xff]
    %v1942 = vld [vmem:[%s8 + $0x30] sm:$0xff]
    %v1943 = vld [vmem:[%s8 + $0x38] sm:$0xff]
    %v1944 = vld [vmem:[%s8 + $0x40] sm:$0xff]
    %v1945 = vld [vmem:[%s8 + $0x48] sm:$0xff]
    %v1946 = vld [vmem:[%s8 + $0x50] sm:$0xff]
    %v1947 = vld [vmem:[%s8 + $0x58] sm:$0xff]
    %v1948 = vld [vmem:[%s8 + $0x60] sm:$0xff]
    %v1949 = vld [vmem:[%s8 + $0x68] sm:$0xff]
    %v1950 = vld [vmem:[%s8 + $0x70] sm:$0xff]
    %v1951 = vld [vmem:[%s8 + $0x78] sm:$0xff]
    %v1952 = vld [vmem:[%s9] sm:$0x1]
    %v1954 = vlaneseq
    %v1955 = vshrl.u32 %v1954, 7
    %v1956 = vsub.s32 0, %v1955
    %v1957 = vrot.slane %v1952, %v1956
    %1959 = vmatprep.subr.mxu0 0.0
    %1960 = vmatpush1.msra.mxu0 %v1936
    %1961 = vmatprep.subr.mxu0 0.0
    %1962 = vmatpush1.msra.mxu0 %v1937
    %1963 = vmatprep.subr.mxu0 0.0
    %1964 = vmatpush1.msra.mxu0 %v1938
    %1965 = vmatprep.subr.mxu0 0.0
    %1966 = vmatpush1.msra.mxu0 %v1939
    %1967 = vmatprep.subr.mxu0 0.0
    %1968 = vmatpush1.msra.mxu0 %v1940
    %1969 = vmatprep.subr.mxu0 0.0
    %1970 = vmatpush1.msra.mxu0 %v1941
    %1971 = vmatprep.subr.mxu0 0.0
    %1972 = vmatpush1.msra.mxu0 %v1942
    %1973 = vmatprep.subr.mxu0 0.0
    %1974 = vmatpush1.msra.mxu0 %v1943
    %1975 = vmatprep.subr.mxu0 0.0
    %1976 = vmatpush1.msra.mxu0 %v1944
    %1977 = vmatprep.subr.mxu0 0.0
    %1978 = vmatpush1.msra.mxu0 %v1945
    %1979 = vmatprep.subr.mxu0 0.0
    %1980 = vmatpush1.msra.mxu0 %v1946
    %1981 = vmatprep.subr.mxu0 0.0
    %1982 = vmatpush1.msra.mxu0 %v1947
    %1983 = vmatprep.subr.mxu0 0.0
    %1984 = vmatpush1.msra.mxu0 %v1948
    %1985 = vmatprep.subr.mxu0 0.0
    %1986 = vmatpush1.msra.mxu0 %v1949
    %1987 = vmatprep.subr.mxu0 0.0
    %1988 = vmatpush1.msra.mxu0 %v1950
    %1989 = vmatprep.subr.mxu0 0.0
    %1990 = vmatpush1.msra.mxu0 %v1951
    %1991 = vmatprep.subr.mxu0 0.0
    %1992 = vmatpush1.msra.mxu0 0.0
    %1993 = vmatprep.subr.mxu0 0.0
    %1994 = vmatpush1.msra.mxu0 0.0
    %1995 = vmatprep.subr.mxu0 0.0
    %1996 = vmatpush1.msra.mxu0 0.0
    %1997 = vmatprep.subr.mxu0 0.0
    %1998 = vmatpush1.msra.mxu0 0.0
    %1999 = vmatprep.subr.mxu0 0.0
    %2000 = vmatpush1.msra.mxu0 0.0
    %2001 = vmatprep.subr.mxu0 0.0
    %2002 = vmatpush1.msra.mxu0 0.0
    %2003 = vmatprep.subr.mxu0 0.0
    %2004 = vmatpush1.msra.mxu0 0.0
    %2005 = vmatprep.subr.mxu0 0.0
    %2006 = vmatpush1.msra.mxu0 0.0
    %2007 = vmatprep.subr.mxu0 0.0
    %2008 = vmatpush1.msra.mxu0 0.0
    %2009 = vmatprep.subr.mxu0 0.0
    %2010 = vmatpush1.msra.mxu0 0.0
    %2011 = vmatprep.subr.mxu0 0.0
    %2012 = vmatpush1.msra.mxu0 0.0
    %2013 = vmatprep.subr.mxu0 0.0
    %2014 = vmatpush1.msra.mxu0 0.0
    %2015 = vmatprep.subr.mxu0 0.0
    %2016 = vmatpush1.msra.mxu0 0.0
    %2017 = vmatprep.subr.mxu0 0.0
    %2018 = vmatpush1.msra.mxu0 0.0
    %2019 = vmatprep.subr.mxu0 0.0
    %2020 = vmatpush1.msra.mxu0 0.0
    %2021 = vmatprep.subr.mxu0 0.0
    %2022 = vmatpush1.msra.mxu0 0.0
    %2023 = vmatprep.mubr.f32.mxu0 0.0
    %2024 = vmatmul.mubr.f32.gmra.mrb[0].mxu0 %v1935
    %v2025 = vpop.f32.mrb[0].mxu0
    %v2026 = vadd.f32 %v1957, %v2025
    %v2027 = vpop.f32.mrb[0].mxu0
    %2028 = vdwg.mxu0
    %v2029 = vxor.u32 %v2026, 2147483648
    %v2030 = vmul.f32 %v2029, 1.442695
    %v2031 = vpow.pop %v2030
    %v2032 = vadd.f32 %v2031, 1.0
    %v2033 = vrcp.pop %v2032
    %v2034 = vmul.f32 1.0, %v2033
    %v2035 = vmax.f32 %v2034, 1e-06
    %v2036 = vmin.f32 %v2035, 0.999999
    %2037 = vst [vmem:[%s10] sm:$0xff] %v2036
    // Predicated region
    $region50: #{vnet_forward.1} parent=1 // pred_check
      _
    $region51: #{vnet_forward.1} parent=1 // pred_check_branch
      %2039 = sbr.rel (0) target = $region53
    $region52: #{vnet_forward.1} parent=1 // pred_region
      _
    $region53: #{vnet_forward.1} parent=1 // pred_fallthru
      _
    // Predicated region
    $region54: #{vnet_forward.1} parent=1 // pred_check
      _
    $region55: #{vnet_forward.1} parent=1 // pred_check_branch
      %2041 = sbr.rel (0) target = $region57
    $region56: #{vnet_forward.1} parent=1 // pred_region
      _
    $region57: #{vnet_forward.1} parent=1 // pred_fallthru
      _
    %2042 = vsyncpa [#allocation4], 1
    %2043 = vsyncpa [#allocation6], 1

</llo_original>
